<compile_context>
chip_gen: v7x
topology: tpu7x:2x2x1
jax: 0.10.0
libtpu: 0.0.40
codegen_flags: <defaults>
</compile_context>

<pallas_src>
import functools

import jax
import jax.numpy as jnp
from jax import lax
from jax.experimental import pallas as pl
from jax.experimental.pallas import tpu as pltpu


def _sel_matrix(rows, cols, pred):
    """0/1 selection matrix (bf16-exact) built from 2D iota."""
    r = lax.broadcasted_iota(jnp.int32, (rows, cols), 0)
    c = lax.broadcasted_iota(jnp.int32, (rows, cols), 1)
    return jnp.where(pred(r, c), 1.0, 0.0).astype(jnp.bfloat16)


def _shape_pool_kernel(x_ref, o_ref, *, dh, dw, k_axis_first):
    # x_ref: (td, H, W)
    # o_ref: (td, 4, dh, dw)  [depth mode]   or   (4, td, dh, dw)  [channel mode]
    td, H, W = x_ref.shape
    f32, bf16 = jnp.float32, jnp.bfloat16

    # P_j (W, dw): P_j[s, w] = 1  iff  s == 2*w + j   -> picks columns of parity j.
    P = [_sel_matrix(W, dw, lambda s, w, j=j: s == 2 * w + j) for j in (0, 1)]
    # Q_i (dh, H): Q_i[h, r] = 1  iff  r == 2*h + i   -> picks rows of parity i.
    Q = [_sel_matrix(dh, H, lambda h, r, i=i: r == 2 * h + i) for i in (0, 1)]

    for g in range(td):
        # Process one (H, W) slab at a time (bounds live vreg pressure vs. the whole block).
        xf = x_ref[g].astype(f32)                      # exact up-cast
        hi = xf.astype(bf16)                           # bf16-exact plane 1
        rem = xf - hi.astype(f32)                      # exact residual (fits f32)
        rhi = rem.astype(bf16)                         # bf16-exact plane 2
        rlo = (rem - rhi.astype(f32)).astype(bf16)     # bf16-exact plane 3

        for j in (0, 1):
            # Column (lane) de-interleave on the MXU; results remain bf16-exact.
            t_hi = jnp.dot(hi, P[j], preferred_element_type=f32).astype(bf16)
            t_rhi = jnp.dot(rhi, P[j], preferred_element_type=f32).astype(bf16)
            t_rlo = jnp.dot(rlo, P[j], preferred_element_type=f32).astype(bf16)
            for i in (0, 1):
                # Row (sublane) de-interleave; re-sum planes in an error-free order:
                # (rem_hi + rem_lo) == rem exactly, then hi + rem == x exactly.
                a0 = jnp.dot(Q[i], t_hi, preferred_element_type=f32)
                a1 = jnp.dot(Q[i], t_rhi, preferred_element_type=f32)
                a2 = jnp.dot(Q[i], t_rlo, preferred_element_type=f32)
                blk = (a0 + (a1 + a2)).astype(o_ref.dtype)   # (dh, dw)
                k = 2 * i + j
                if k_axis_first:
                    o_ref[k, g] = blk
                else:
                    o_ref[g, k] = blk


def _pick_td(D, slab_bytes, cap_bytes=1 << 20, cap_td=8):
    """Largest divisor of D (<= cap_td) keeping the input block under cap_bytes."""
    td = 1
    for cand in range(1, min(D, cap_td) + 1):
        if D % cand == 0 and cand * slab_bytes <= cap_bytes:
            td = cand
    return td


def shape_pool_2d_xd(x, block_size=2, stack_dim="depth"):
    """Pallas implementation of ShapePool2DXD.forward.

    x: (B, C, D, H, W)  (PyTorch NCDHW-style layout)
    returns:
      stack_dim='depth'  : (B, C, D*4, H//2, W//2)
      stack_dim='channel': (B, C*4, D, H//2, W//2)
    """
    assert stack_dim in ("depth", "channel")
    # The PyTorch forward hardcodes a factor of 2 in its .view(), so only block_size=2
    # is consistent with the module.
    assert block_size == 2, "ShapePool2DXD forward only supports block_size=2"
    assert jnp.issubdtype(x.dtype, jnp.floating) and x.dtype.itemsize <= 4

    B, C, D, H, W = x.shape
    assert H % 2 == 0, "height must be even"
    dh = H // 2
    dw = H // 2  # NB: module computes d_width from s_height (quirk preserved)
    assert W == 2 * dw, "module requires width == 2 * (height // 2)"

    td = _pick_td(D, H * W * x.dtype.itemsize)

    # Free, contiguous reshape (no data movement): (B, C, D, H, W) -> (B*C, D, H, W).
    xr = x.reshape(B * C, D, H, W)
    in_spec = pl.BlockSpec((None, td, H, W), lambda bc, dt: (bc, dt, 0, 0))

    if stack_dim == "depth":
        # out[bc, d, k, h, w] ; final depth index = 4*d + k  (free reshape below).
        out_arr_shape = (B * C, D, 4, dh, dw)
        out_spec = pl.BlockSpec((None, td, 4, dh, dw), lambda bc, dt: (bc, dt, 0, 0, 0))
        k_axis_first = False
    else:
        # out[b, k, c, d, h, w] ; final channel index = k*C + c  (free reshape below).
        out_arr_shape = (B, 4, C, D, dh, dw)
        out_spec = pl.BlockSpec(
            (None, 4, None, td, dh, dw),
            lambda bc, dt: (bc // C, 0, bc % C, dt, 0, 0),
        )
        k_axis_first = True

    kernel = functools.partial(
        _shape_pool_kernel, dh=dh, dw=dw, k_axis_first=k_axis_first
    )

    # Advisory cost estimate: pure data movement (2 HBM passes) + selection matmuls.
    flops = int(6 * H * W * (H + W) * B * C * D)
    bytes_accessed = int(2 * x.size * x.dtype.itemsize)

    yk = pl.pallas_call(
        kernel,
        out_shape=jax.ShapeDtypeStruct(out_arr_shape, x.dtype),
        grid=(B * C, D // td),
        in_specs=[in_spec],
        out_specs=out_spec,
        compiler_params=pltpu.CompilerParams(
            dimension_semantics=("parallel", "parallel"),
        ),
        cost_estimate=pl.CostEstimate(
            flops=flops, transcendentals=0, bytes_accessed=bytes_accessed
        ),
    )(xr)

    # Free, contiguous reshapes back to the PyTorch output convention (no HBM pass).
    if stack_dim == "depth":
        return yk.reshape(B, C, D * 4, dh, dw)
    else:
        return yk.reshape(B, 4 * C, D, dh, dw)


def _reference_forward(x, stack_dim):
    # pure-JAX re-statement of the PyTorch view/permute/view chain (for verification)
    B, C, D, H, W = x.shape
    dh = H // 2
    dw = H // 2
    t = x.reshape(B, C, D, dh, 2, dw, 2)
    if stack_dim == "depth":
        t = jnp.transpose(t, (0, 1, 2, 4, 6, 3, 5))
        return t.reshape(B, C, D * 4, dh, dw)
    else:
        t = jnp.transpose(t, (0, 4, 6, 1, 2, 3, 5))
        return t.reshape(B, C * 4, D, dh, dw)


if __name__ == "__main__":
    key = jax.random.PRNGKey(0)
    # small shapes consistent with the module: (batch, channel, depth, height, width)
    x = jax.random.normal(key, (2, 4, 2, 8, 8), dtype=jnp.float32)

    out_depth = shape_pool_2d_xd(x, block_size=2, stack_dim="depth")
    out_channel = shape_pool_2d_xd(x, block_size=2, stack_dim="channel")
    jax.block_until_ready(out_depth)
    jax.block_until_ready(out_channel)

    ref_depth = _reference_forward(x, "depth")
    ref_channel = _reference_forward(x, "channel")

    assert out_depth.shape == (2, 4, 8, 4, 4), out_depth.shape
    assert out_channel.shape == (2, 16, 2, 4, 4), out_channel.shape
    assert jnp.array_equal(out_depth, ref_depth)
    assert jnp.array_equal(out_channel, ref_channel)

    print("KERNEL_OK")
</pallas_src>

<mosaic_0001>
module attributes {stable_mosaic.version = 11 : i64} {
  func.func @_shape_pool_kernel(%arg0: i32, %arg1: i32, %arg2: memref<1x2x8x8xf32, #tpu.memory_space<vmem>>, %arg3: memref<1x2x4x4x4xf32, #tpu.memory_space<vmem>>) attributes {dimension_semantics = [#tpu.dimension_semantics<parallel>, #tpu.dimension_semantics<parallel>], iteration_bounds = array<i64: 8, 1>, scalar_prefetch = 0 : i64, scratch_operands = 0 : i64, tpu.core_type = #tpu.core_type<tc>, window_params = [{transform_indices = @transform_0, window_bounds = array<i64: 1, 2, 8, 8>}, {transform_indices = @transform_1, window_bounds = array<i64: 1, 2, 4, 4, 4>}]} {
    %0 = tpu.iota {dimensions = array<i32: 0>} : vector<8x4xi32>
    %1 = tpu.iota {dimensions = array<i32: 1>} : vector<8x4xi32>
    %c2_i32 = arith.constant 2 : i32
    %2 = vector.broadcast %c2_i32 : i32 to vector<8x4xi32>
    %3 = arith.muli %2, %1 : vector<8x4xi32>
    %c0_i32 = arith.constant 0 : i32
    %4 = vector.broadcast %c0_i32 : i32 to vector<8x4xi32>
    %5 = arith.addi %3, %4 : vector<8x4xi32>
    %6 = arith.cmpi eq, %0, %5 : vector<8x4xi32>
    %cst = arith.constant 1.000000e+00 : f32
    %cst_0 = arith.constant 0.000000e+00 : f32
    %7 = vector.broadcast %cst : f32 to vector<8x4xf32>
    %8 = vector.broadcast %cst_0 : f32 to vector<8x4xf32>
    %9 = arith.select %6, %7, %8 : vector<8x4xi1>, vector<8x4xf32>
    %10 = arith.truncf %9 : vector<8x4xf32> to vector<8x4xbf16>
    %11 = tpu.iota {dimensions = array<i32: 0>} : vector<8x4xi32>
    %12 = tpu.iota {dimensions = array<i32: 1>} : vector<8x4xi32>
    %c2_i32_1 = arith.constant 2 : i32
    %13 = vector.broadcast %c2_i32_1 : i32 to vector<8x4xi32>
    %14 = arith.muli %13, %12 : vector<8x4xi32>
    %c1_i32 = arith.constant 1 : i32
    %15 = vector.broadcast %c1_i32 : i32 to vector<8x4xi32>
    %16 = arith.addi %14, %15 : vector<8x4xi32>
    %17 = arith.cmpi eq, %11, %16 : vector<8x4xi32>
    %cst_2 = arith.constant 1.000000e+00 : f32
    %cst_3 = arith.constant 0.000000e+00 : f32
    %18 = vector.broadcast %cst_2 : f32 to vector<8x4xf32>
    %19 = vector.broadcast %cst_3 : f32 to vector<8x4xf32>
    %20 = arith.select %17, %18, %19 : vector<8x4xi1>, vector<8x4xf32>
    %21 = arith.truncf %20 : vector<8x4xf32> to vector<8x4xbf16>
    %22 = tpu.iota {dimensions = array<i32: 0>} : vector<4x8xi32>
    %23 = tpu.iota {dimensions = array<i32: 1>} : vector<4x8xi32>
    %c2_i32_4 = arith.constant 2 : i32
    %24 = vector.broadcast %c2_i32_4 : i32 to vector<4x8xi32>
    %25 = arith.muli %24, %22 : vector<4x8xi32>
    %c0_i32_5 = arith.constant 0 : i32
    %26 = vector.broadcast %c0_i32_5 : i32 to vector<4x8xi32>
    %27 = arith.addi %25, %26 : vector<4x8xi32>
    %28 = arith.cmpi eq, %23, %27 : vector<4x8xi32>
    %cst_6 = arith.constant 1.000000e+00 : f32
    %cst_7 = arith.constant 0.000000e+00 : f32
    %29 = vector.broadcast %cst_6 : f32 to vector<4x8xf32>
    %30 = vector.broadcast %cst_7 : f32 to vector<4x8xf32>
    %31 = arith.select %28, %29, %30 : vector<4x8xi1>, vector<4x8xf32>
    %32 = arith.truncf %31 : vector<4x8xf32> to vector<4x8xbf16>
    %33 = tpu.iota {dimensions = array<i32: 0>} : vector<4x8xi32>
    %34 = tpu.iota {dimensions = array<i32: 1>} : vector<4x8xi32>
    %c2_i32_8 = arith.constant 2 : i32
    %35 = vector.broadcast %c2_i32_8 : i32 to vector<4x8xi32>
    %36 = arith.muli %35, %33 : vector<4x8xi32>
    %c1_i32_9 = arith.constant 1 : i32
    %37 = vector.broadcast %c1_i32_9 : i32 to vector<4x8xi32>
    %38 = arith.addi %36, %37 : vector<4x8xi32>
    %39 = arith.cmpi eq, %34, %38 : vector<4x8xi32>
    %cst_10 = arith.constant 1.000000e+00 : f32
    %cst_11 = arith.constant 0.000000e+00 : f32
    %40 = vector.broadcast %cst_10 : f32 to vector<4x8xf32>
    %41 = vector.broadcast %cst_11 : f32 to vector<4x8xf32>
    %42 = arith.select %39, %40, %41 : vector<4x8xi1>, vector<4x8xf32>
    %43 = arith.truncf %42 : vector<4x8xf32> to vector<4x8xbf16>
    %c0 = arith.constant 0 : index
    %c0_12 = arith.constant 0 : index
    %c0_13 = arith.constant 0 : index
    %c0_14 = arith.constant 0 : index
    %44 = vector.load %arg2[%c0, %c0_12, %c0_13, %c0_14] : memref<1x2x8x8xf32, #tpu.memory_space<vmem>>, vector<1x1x8x8xf32>
    %45 = vector.shape_cast %44 : vector<1x1x8x8xf32> to vector<8x8xf32>
    %46 = arith.truncf %45 : vector<8x8xf32> to vector<8x8xbf16>
    %47 = arith.extf %46 : vector<8x8xbf16> to vector<8x8xf32>
    %48 = arith.subf %45, %47 : vector<8x8xf32>
    %49 = arith.truncf %48 : vector<8x8xf32> to vector<8x8xbf16>
    %50 = arith.extf %49 : vector<8x8xbf16> to vector<8x8xf32>
    %51 = arith.subf %48, %50 : vector<8x8xf32>
    %52 = arith.truncf %51 : vector<8x8xf32> to vector<8x8xbf16>
    %cst_15 = arith.constant dense<0.000000e+00> : vector<8x4xf32>
    %53 = tpu.matmul %46, %10, %cst_15 {dimension_numbers = #tpu.dot_dimension_numbers<[1], [0], [0], [1], [0, 0, 1, 1], [], []>} : vector<8x8xbf16>, vector<8x4xbf16>, vector<8x4xf32> -> vector<8x4xf32>
    %54 = arith.truncf %53 : vector<8x4xf32> to vector<8x4xbf16>
    %cst_16 = arith.constant dense<0.000000e+00> : vector<8x4xf32>
    %55 = tpu.matmul %49, %10, %cst_16 {dimension_numbers = #tpu.dot_dimension_numbers<[1], [0], [0], [1], [0, 0, 1, 1], [], []>} : vector<8x8xbf16>, vector<8x4xbf16>, vector<8x4xf32> -> vector<8x4xf32>
    %56 = arith.truncf %55 : vector<8x4xf32> to vector<8x4xbf16>
    %cst_17 = arith.constant dense<0.000000e+00> : vector<8x4xf32>
    %57 = tpu.matmul %52, %10, %cst_17 {dimension_numbers = #tpu.dot_dimension_numbers<[1], [0], [0], [1], [0, 0, 1, 1], [], []>} : vector<8x8xbf16>, vector<8x4xbf16>, vector<8x4xf32> -> vector<8x4xf32>
    %58 = arith.truncf %57 : vector<8x4xf32> to vector<8x4xbf16>
    %cst_18 = arith.constant dense<0.000000e+00> : vector<4x4xf32>
    %59 = tpu.matmul %32, %54, %cst_18 {dimension_numbers = #tpu.dot_dimension_numbers<[1], [0], [0], [1], [0, 0, 1, 1], [], []>} : vector<4x8xbf16>, vector<8x4xbf16>, vector<4x4xf32> -> vector<4x4xf32>
    %cst_19 = arith.constant dense<0.000000e+00> : vector<4x4xf32>
    %60 = tpu.matmul %32, %56, %cst_19 {dimension_numbers = #tpu.dot_dimension_numbers<[1], [0], [0], [1], [0, 0, 1, 1], [], []>} : vector<4x8xbf16>, vector<8x4xbf16>, vector<4x4xf32> -> vector<4x4xf32>
    %cst_20 = arith.constant dense<0.000000e+00> : vector<4x4xf32>
    %61 = tpu.matmul %32, %58, %cst_20 {dimension_numbers = #tpu.dot_dimension_numbers<[1], [0], [0], [1], [0, 0, 1, 1], [], []>} : vector<4x8xbf16>, vector<8x4xbf16>, vector<4x4xf32> -> vector<4x4xf32>
    %62 = arith.addf %60, %61 : vector<4x4xf32>
    %63 = arith.addf %59, %62 : vector<4x4xf32>
    %c0_21 = arith.constant 0 : index
    %c0_22 = arith.constant 0 : index
    %c0_23 = arith.constant 0 : index
    %c0_24 = arith.constant 0 : index
    %c0_25 = arith.constant 0 : index
    %64 = vector.load %arg3[%c0_21, %c0_22, %c0_23, %c0_24, %c0_25] : memref<1x2x4x4x4xf32, #tpu.memory_space<vmem>>, vector<1x1x1x4x4xf32>
    %65 = vector.shape_cast %64 : vector<1x1x1x4x4xf32> to vector<4x4xf32>
    %66 = vector.shape_cast %63 : vector<4x4xf32> to vector<1x1x1x4x4xf32>
    tpu.vector_store %arg3[%c0_21, %c0_22, %c0_23, %c0_24, %c0_25], %66 {strides = array<i32>} : memref<1x2x4x4x4xf32, #tpu.memory_space<vmem>>, vector<1x1x1x4x4xf32>,
    %cst_26 = arith.constant dense<0.000000e+00> : vector<4x4xf32>
    %67 = tpu.matmul %43, %54, %cst_26 {dimension_numbers = #tpu.dot_dimension_numbers<[1], [0], [0], [1], [0, 0, 1, 1], [], []>} : vector<4x8xbf16>, vector<8x4xbf16>, vector<4x4xf32> -> vector<4x4xf32>
    %cst_27 = arith.constant dense<0.000000e+00> : vector<4x4xf32>
    %68 = tpu.matmul %43, %56, %cst_27 {dimension_numbers = #tpu.dot_dimension_numbers<[1], [0], [0], [1], [0, 0, 1, 1], [], []>} : vector<4x8xbf16>, vector<8x4xbf16>, vector<4x4xf32> -> vector<4x4xf32>
    %cst_28 = arith.constant dense<0.000000e+00> : vector<4x4xf32>
    %69 = tpu.matmul %43, %58, %cst_28 {dimension_numbers = #tpu.dot_dimension_numbers<[1], [0], [0], [1], [0, 0, 1, 1], [], []>} : vector<4x8xbf16>, vector<8x4xbf16>, vector<4x4xf32> -> vector<4x4xf32>
    %70 = arith.addf %68, %69 : vector<4x4xf32>
    %71 = arith.addf %67, %70 : vector<4x4xf32>
    %c0_29 = arith.constant 0 : index
    %c0_30 = arith.constant 0 : index
    %c2 = arith.constant 2 : index
    %c0_31 = arith.constant 0 : index
    %c0_32 = arith.constant 0 : index
    %72 = vector.load %arg3[%c0_29, %c0_30, %c2, %c0_31, %c0_32] : memref<1x2x4x4x4xf32, #tpu.memory_space<vmem>>, vector<1x1x1x4x4xf32>
    %73 = vector.shape_cast %72 : vector<1x1x1x4x4xf32> to vector<4x4xf32>
    %74 = vector.shape_cast %71 : vector<4x4xf32> to vector<1x1x1x4x4xf32>
    tpu.vector_store %arg3[%c0_29, %c0_30, %c2, %c0_31, %c0_32], %74 {strides = array<i32>} : memref<1x2x4x4x4xf32, #tpu.memory_space<vmem>>, vector<1x1x1x4x4xf32>,
    %cst_33 = arith.constant dense<0.000000e+00> : vector<8x4xf32>
    %75 = tpu.matmul %46, %21, %cst_33 {dimension_numbers = #tpu.dot_dimension_numbers<[1], [0], [0], [1], [0, 0, 1, 1], [], []>} : vector<8x8xbf16>, vector<8x4xbf16>, vector<8x4xf32> -> vector<8x4xf32>
    %76 = arith.truncf %75 : vector<8x4xf32> to vector<8x4xbf16>
    %cst_34 = arith.constant dense<0.000000e+00> : vector<8x4xf32>
    %77 = tpu.matmul %49, %21, %cst_34 {dimension_numbers = #tpu.dot_dimension_numbers<[1], [0], [0], [1], [0, 0, 1, 1], [], []>} : vector<8x8xbf16>, vector<8x4xbf16>, vector<8x4xf32> -> vector<8x4xf32>
    %78 = arith.truncf %77 : vector<8x4xf32> to vector<8x4xbf16>
    %cst_35 = arith.constant dense<0.000000e+00> : vector<8x4xf32>
    %79 = tpu.matmul %52, %21, %cst_35 {dimension_numbers = #tpu.dot_dimension_numbers<[1], [0], [0], [1], [0, 0, 1, 1], [], []>} : vector<8x8xbf16>, vector<8x4xbf16>, vector<8x4xf32> -> vector<8x4xf32>
    %80 = arith.truncf %79 : vector<8x4xf32> to vector<8x4xbf16>
    %cst_36 = arith.constant dense<0.000000e+00> : vector<4x4xf32>
    %81 = tpu.matmul %32, %76, %cst_36 {dimension_numbers = #tpu.dot_dimension_numbers<[1], [0], [0], [1], [0, 0, 1, 1], [], []>} : vector<4x8xbf16>, vector<8x4xbf16>, vector<4x4xf32> -> vector<4x4xf32>
    %cst_37 = arith.constant dense<0.000000e+00> : vector<4x4xf32>
    %82 = tpu.matmul %32, %78, %cst_37 {dimension_numbers = #tpu.dot_dimension_numbers<[1], [0], [0], [1], [0, 0, 1, 1], [], []>} : vector<4x8xbf16>, vector<8x4xbf16>, vector<4x4xf32> -> vector<4x4xf32>
    %cst_38 = arith.constant dense<0.000000e+00> : vector<4x4xf32>
    %83 = tpu.matmul %32, %80, %cst_38 {dimension_numbers = #tpu.dot_dimension_numbers<[1], [0], [0], [1], [0, 0, 1, 1], [], []>} : vector<4x8xbf16>, vector<8x4xbf16>, vector<4x4xf32> -> vector<4x4xf32>
    %84 = arith.addf %82, %83 : vector<4x4xf32>
    %85 = arith.addf %81, %84 : vector<4x4xf32>
    %c0_39 = arith.constant 0 : index
    %c0_40 = arith.constant 0 : index
    %c1 = arith.constant 1 : index
    %c0_41 = arith.constant 0 : index
    %c0_42 = arith.constant 0 : index
    %86 = vector.load %arg3[%c0_39, %c0_40, %c1, %c0_41, %c0_42] : memref<1x2x4x4x4xf32, #tpu.memory_space<vmem>>, vector<1x1x1x4x4xf32>
    %87 = vector.shape_cast %86 : vector<1x1x1x4x4xf32> to vector<4x4xf32>
    %88 = vector.shape_cast %85 : vector<4x4xf32> to vector<1x1x1x4x4xf32>
    tpu.vector_store %arg3[%c0_39, %c0_40, %c1, %c0_41, %c0_42], %88 {strides = array<i32>} : memref<1x2x4x4x4xf32, #tpu.memory_space<vmem>>, vector<1x1x1x4x4xf32>,
    %cst_43 = arith.constant dense<0.000000e+00> : vector<4x4xf32>
    %89 = tpu.matmul %43, %76, %cst_43 {dimension_numbers = #tpu.dot_dimension_numbers<[1], [0], [0], [1], [0, 0, 1, 1], [], []>} : vector<4x8xbf16>, vector<8x4xbf16>, vector<4x4xf32> -> vector<4x4xf32>
    %cst_44 = arith.constant dense<0.000000e+00> : vector<4x4xf32>
    %90 = tpu.matmul %43, %78, %cst_44 {dimension_numbers = #tpu.dot_dimension_numbers<[1], [0], [0], [1], [0, 0, 1, 1], [], []>} : vector<4x8xbf16>, vector<8x4xbf16>, vector<4x4xf32> -> vector<4x4xf32>
    %cst_45 = arith.constant dense<0.000000e+00> : vector<4x4xf32>
    %91 = tpu.matmul %43, %80, %cst_45 {dimension_numbers = #tpu.dot_dimension_numbers<[1], [0], [0], [1], [0, 0, 1, 1], [], []>} : vector<4x8xbf16>, vector<8x4xbf16>, vector<4x4xf32> -> vector<4x4xf32>
    %92 = arith.addf %90, %91 : vector<4x4xf32>
    %93 = arith.addf %89, %92 : vector<4x4xf32>
    %c0_46 = arith.constant 0 : index
    %c0_47 = arith.constant 0 : index
    %c3 = arith.constant 3 : index
    %c0_48 = arith.constant 0 : index
    %c0_49 = arith.constant 0 : index
    %94 = vector.load %arg3[%c0_46, %c0_47, %c3, %c0_48, %c0_49] : memref<1x2x4x4x4xf32, #tpu.memory_space<vmem>>, vector<1x1x1x4x4xf32>
    %95 = vector.shape_cast %94 : vector<1x1x1x4x4xf32> to vector<4x4xf32>
    %96 = vector.shape_cast %93 : vector<4x4xf32> to vector<1x1x1x4x4xf32>
    tpu.vector_store %arg3[%c0_46, %c0_47, %c3, %c0_48, %c0_49], %96 {strides = array<i32>} : memref<1x2x4x4x4xf32, #tpu.memory_space<vmem>>, vector<1x1x1x4x4xf32>,
    %c0_50 = arith.constant 0 : index
    %c1_51 = arith.constant 1 : index
    %c0_52 = arith.constant 0 : index
    %c0_53 = arith.constant 0 : index
    %97 = vector.load %arg2[%c0_50, %c1_51, %c0_52, %c0_53] : memref<1x2x8x8xf32, #tpu.memory_space<vmem>>, vector<1x1x8x8xf32>
    %98 = vector.shape_cast %97 : vector<1x1x8x8xf32> to vector<8x8xf32>
    %99 = arith.truncf %98 : vector<8x8xf32> to vector<8x8xbf16>
    %100 = arith.extf %99 : vector<8x8xbf16> to vector<8x8xf32>
    %101 = arith.subf %98, %100 : vector<8x8xf32>
    %102 = arith.truncf %101 : vector<8x8xf32> to vector<8x8xbf16>
    %103 = arith.extf %102 : vector<8x8xbf16> to vector<8x8xf32>
    %104 = arith.subf %101, %103 : vector<8x8xf32>
    %105 = arith.truncf %104 : vector<8x8xf32> to vector<8x8xbf16>
    %cst_54 = arith.constant dense<0.000000e+00> : vector<8x4xf32>
    %106 = tpu.matmul %99, %10, %cst_54 {dimension_numbers = #tpu.dot_dimension_numbers<[1], [0], [0], [1], [0, 0, 1, 1], [], []>} : vector<8x8xbf16>, vector<8x4xbf16>, vector<8x4xf32> -> vector<8x4xf32>
    %107 = arith.truncf %106 : vector<8x4xf32> to vector<8x4xbf16>
    %cst_55 = arith.constant dense<0.000000e+00> : vector<8x4xf32>
    %108 = tpu.matmul %102, %10, %cst_55 {dimension_numbers = #tpu.dot_dimension_numbers<[1], [0], [0], [1], [0, 0, 1, 1], [], []>} : vector<8x8xbf16>, vector<8x4xbf16>, vector<8x4xf32> -> vector<8x4xf32>
    %109 = arith.truncf %108 : vector<8x4xf32> to vector<8x4xbf16>
    %cst_56 = arith.constant dense<0.000000e+00> : vector<8x4xf32>
    %110 = tpu.matmul %105, %10, %cst_56 {dimension_numbers = #tpu.dot_dimension_numbers<[1], [0], [0], [1], [0, 0, 1, 1], [], []>} : vector<8x8xbf16>, vector<8x4xbf16>, vector<8x4xf32> -> vector<8x4xf32>
    %111 = arith.truncf %110 : vector<8x4xf32> to vector<8x4xbf16>
    %cst_57 = arith.constant dense<0.000000e+00> : vector<4x4xf32>
    %112 = tpu.matmul %32, %107, %cst_57 {dimension_numbers = #tpu.dot_dimension_numbers<[1], [0], [0], [1], [0, 0, 1, 1], [], []>} : vector<4x8xbf16>, vector<8x4xbf16>, vector<4x4xf32> -> vector<4x4xf32>
    %cst_58 = arith.constant dense<0.000000e+00> : vector<4x4xf32>
    %113 = tpu.matmul %32, %109, %cst_58 {dimension_numbers = #tpu.dot_dimension_numbers<[1], [0], [0], [1], [0, 0, 1, 1], [], []>} : vector<4x8xbf16>, vector<8x4xbf16>, vector<4x4xf32> -> vector<4x4xf32>
    %cst_59 = arith.constant dense<0.000000e+00> : vector<4x4xf32>
    %114 = tpu.matmul %32, %111, %cst_59 {dimension_numbers = #tpu.dot_dimension_numbers<[1], [0], [0], [1], [0, 0, 1, 1], [], []>} : vector<4x8xbf16>, vector<8x4xbf16>, vector<4x4xf32> -> vector<4x4xf32>
    %115 = arith.addf %113, %114 : vector<4x4xf32>
    %116 = arith.addf %112, %115 : vector<4x4xf32>
    %c0_60 = arith.constant 0 : index
    %c1_61 = arith.constant 1 : index
    %c0_62 = arith.constant 0 : index
    %c0_63 = arith.constant 0 : index
    %c0_64 = arith.constant 0 : index
    %117 = vector.load %arg3[%c0_60, %c1_61, %c0_62, %c0_63, %c0_64] : memref<1x2x4x4x4xf32, #tpu.memory_space<vmem>>, vector<1x1x1x4x4xf32>
    %118 = vector.shape_cast %117 : vector<1x1x1x4x4xf32> to vector<4x4xf32>
    %119 = vector.shape_cast %116 : vector<4x4xf32> to vector<1x1x1x4x4xf32>
    tpu.vector_store %arg3[%c0_60, %c1_61, %c0_62, %c0_63, %c0_64], %119 {strides = array<i32>} : memref<1x2x4x4x4xf32, #tpu.memory_space<vmem>>, vector<1x1x1x4x4xf32>,
    %cst_65 = arith.constant dense<0.000000e+00> : vector<4x4xf32>
    %120 = tpu.matmul %43, %107, %cst_65 {dimension_numbers = #tpu.dot_dimension_numbers<[1], [0], [0], [1], [0, 0, 1, 1], [], []>} : vector<4x8xbf16>, vector<8x4xbf16>, vector<4x4xf32> -> vector<4x4xf32>
    %cst_66 = arith.constant dense<0.000000e+00> : vector<4x4xf32>
    %121 = tpu.matmul %43, %109, %cst_66 {dimension_numbers = #tpu.dot_dimension_numbers<[1], [0], [0], [1], [0, 0, 1, 1], [], []>} : vector<4x8xbf16>, vector<8x4xbf16>, vector<4x4xf32> -> vector<4x4xf32>
    %cst_67 = arith.constant dense<0.000000e+00> : vector<4x4xf32>
    %122 = tpu.matmul %43, %111, %cst_67 {dimension_numbers = #tpu.dot_dimension_numbers<[1], [0], [0], [1], [0, 0, 1, 1], [], []>} : vector<4x8xbf16>, vector<8x4xbf16>, vector<4x4xf32> -> vector<4x4xf32>
    %123 = arith.addf %121, %122 : vector<4x4xf32>
    %124 = arith.addf %120, %123 : vector<4x4xf32>
    %c0_68 = arith.constant 0 : index
    %c1_69 = arith.constant 1 : index
    %c2_70 = arith.constant 2 : index
    %c0_71 = arith.constant 0 : index
    %c0_72 = arith.constant 0 : index
    %125 = vector.load %arg3[%c0_68, %c1_69, %c2_70, %c0_71, %c0_72] : memref<1x2x4x4x4xf32, #tpu.memory_space<vmem>>, vector<1x1x1x4x4xf32>
    %126 = vector.shape_cast %125 : vector<1x1x1x4x4xf32> to vector<4x4xf32>
    %127 = vector.shape_cast %124 : vector<4x4xf32> to vector<1x1x1x4x4xf32>
    tpu.vector_store %arg3[%c0_68, %c1_69, %c2_70, %c0_71, %c0_72], %127 {strides = array<i32>} : memref<1x2x4x4x4xf32, #tpu.memory_space<vmem>>, vector<1x1x1x4x4xf32>,
    %cst_73 = arith.constant dense<0.000000e+00> : vector<8x4xf32>
    %128 = tpu.matmul %99, %21, %cst_73 {dimension_numbers = #tpu.dot_dimension_numbers<[1], [0], [0], [1], [0, 0, 1, 1], [], []>} : vector<8x8xbf16>, vector<8x4xbf16>, vector<8x4xf32> -> vector<8x4xf32>
    %129 = arith.truncf %128 : vector<8x4xf32> to vector<8x4xbf16>
    %cst_74 = arith.constant dense<0.000000e+00> : vector<8x4xf32>
    %130 = tpu.matmul %102, %21, %cst_74 {dimension_numbers = #tpu.dot_dimension_numbers<[1], [0], [0], [1], [0, 0, 1, 1], [], []>} : vector<8x8xbf16>, vector<8x4xbf16>, vector<8x4xf32> -> vector<8x4xf32>
    %131 = arith.truncf %130 : vector<8x4xf32> to vector<8x4xbf16>
    %cst_75 = arith.constant dense<0.000000e+00> : vector<8x4xf32>
    %132 = tpu.matmul %105, %21, %cst_75 {dimension_numbers = #tpu.dot_dimension_numbers<[1], [0], [0], [1], [0, 0, 1, 1], [], []>} : vector<8x8xbf16>, vector<8x4xbf16>, vector<8x4xf32> -> vector<8x4xf32>
    %133 = arith.truncf %132 : vector<8x4xf32> to vector<8x4xbf16>
    %cst_76 = arith.constant dense<0.000000e+00> : vector<4x4xf32>
    %134 = tpu.matmul %32, %129, %cst_76 {dimension_numbers = #tpu.dot_dimension_numbers<[1], [0], [0], [1], [0, 0, 1, 1], [], []>} : vector<4x8xbf16>, vector<8x4xbf16>, vector<4x4xf32> -> vector<4x4xf32>
    %cst_77 = arith.constant dense<0.000000e+00> : vector<4x4xf32>
    %135 = tpu.matmul %32, %131, %cst_77 {dimension_numbers = #tpu.dot_dimension_numbers<[1], [0], [0], [1], [0, 0, 1, 1], [], []>} : vector<4x8xbf16>, vector<8x4xbf16>, vector<4x4xf32> -> vector<4x4xf32>
    %cst_78 = arith.constant dense<0.000000e+00> : vector<4x4xf32>
    %136 = tpu.matmul %32, %133, %cst_78 {dimension_numbers = #tpu.dot_dimension_numbers<[1], [0], [0], [1], [0, 0, 1, 1], [], []>} : vector<4x8xbf16>, vector<8x4xbf16>, vector<4x4xf32> -> vector<4x4xf32>
    %137 = arith.addf %135, %136 : vector<4x4xf32>
    %138 = arith.addf %134, %137 : vector<4x4xf32>
    %c0_79 = arith.constant 0 : index
    %c1_80 = arith.constant 1 : index
    %c1_81 = arith.constant 1 : index
    %c0_82 = arith.constant 0 : index
    %c0_83 = arith.constant 0 : index
    %139 = vector.load %arg3[%c0_79, %c1_80, %c1_81, %c0_82, %c0_83] : memref<1x2x4x4x4xf32, #tpu.memory_space<vmem>>, vector<1x1x1x4x4xf32>
    %140 = vector.shape_cast %139 : vector<1x1x1x4x4xf32> to vector<4x4xf32>
    %141 = vector.shape_cast %138 : vector<4x4xf32> to vector<1x1x1x4x4xf32>
    tpu.vector_store %arg3[%c0_79, %c1_80, %c1_81, %c0_82, %c0_83], %141 {strides = array<i32>} : memref<1x2x4x4x4xf32, #tpu.memory_space<vmem>>, vector<1x1x1x4x4xf32>,
    %cst_84 = arith.constant dense<0.000000e+00> : vector<4x4xf32>
    %142 = tpu.matmul %43, %129, %cst_84 {dimension_numbers = #tpu.dot_dimension_numbers<[1], [0], [0], [1], [0, 0, 1, 1], [], []>} : vector<4x8xbf16>, vector<8x4xbf16>, vector<4x4xf32> -> vector<4x4xf32>
    %cst_85 = arith.constant dense<0.000000e+00> : vector<4x4xf32>
    %143 = tpu.matmul %43, %131, %cst_85 {dimension_numbers = #tpu.dot_dimension_numbers<[1], [0], [0], [1], [0, 0, 1, 1], [], []>} : vector<4x8xbf16>, vector<8x4xbf16>, vector<4x4xf32> -> vector<4x4xf32>
    %cst_86 = arith.constant dense<0.000000e+00> : vector<4x4xf32>
    %144 = tpu.matmul %43, %133, %cst_86 {dimension_numbers = #tpu.dot_dimension_numbers<[1], [0], [0], [1], [0, 0, 1, 1], [], []>} : vector<4x8xbf16>, vector<8x4xbf16>, vector<4x4xf32> -> vector<4x4xf32>
    %145 = arith.addf %143, %144 : vector<4x4xf32>
    %146 = arith.addf %142, %145 : vector<4x4xf32>
    %c0_87 = arith.constant 0 : index
    %c1_88 = arith.constant 1 : index
    %c3_89 = arith.constant 3 : index
    %c0_90 = arith.constant 0 : index
    %c0_91 = arith.constant 0 : index
    %147 = vector.load %arg3[%c0_87, %c1_88, %c3_89, %c0_90, %c0_91] : memref<1x2x4x4x4xf32, #tpu.memory_space<vmem>>, vector<1x1x1x4x4xf32>
    %148 = vector.shape_cast %147 : vector<1x1x1x4x4xf32> to vector<4x4xf32>
    %149 = vector.shape_cast %146 : vector<4x4xf32> to vector<1x1x1x4x4xf32>
    tpu.vector_store %arg3[%c0_87, %c1_88, %c3_89, %c0_90, %c0_91], %149 {strides = array<i32>} : memref<1x2x4x4x4xf32, #tpu.memory_space<vmem>>, vector<1x1x1x4x4xf32>,
    return
  }
  func.func @transform_0(%arg0: i32, %arg1: i32) -> (i32, i32, i32, i32) {
    %c0_i32 = arith.constant 0 : i32
    %c0_i32_0 = arith.constant 0 : i32
    %c0_i32_1 = arith.constant 0 : i32
    return %arg0, %arg1, %c0_i32, %c0_i32_0 : i32, i32, i32, i32
  }
  func.func @transform_1(%arg0: i32, %arg1: i32) -> (i32, i32, i32, i32, i32) {
    %c0_i32 = arith.constant 0 : i32
    %c0_i32_0 = arith.constant 0 : i32
    %c0_i32_1 = arith.constant 0 : i32
    %c0_i32_2 = arith.constant 0 : i32
    return %arg0, %arg1, %c0_i32, %c0_i32_0, %c0_i32_1 : i32, i32, i32, i32, i32
  }
}

</mosaic_0001>

<llo_original>
// kernel: tpu_custom_call.1
$region0: #{tpu_custom_call.1}
  #allocation0 [shape = 'u32[]', space=smem, size = 0x4, offset = 0x4, fixed_abs, tag = 'smem constant byte address 0x4 - core index']
  #allocation1 [shape = 'u32[144,128]{1,0:T(1,128)}', space=vmem, size = 0x12000, scoped, tag = 'internal scratch']
  %s0 = inlined_call_operand.hbm [shape: f32[8,2,8,8], index: 0, kind: input, shape index: {}]
  %s1 = inlined_call_operand.vmem [shape: f32[8,2,4,4,4], index: 1, kind: output, shape index: {}]
  %s2 = sld [smem:[#allocation0]]
  $region41: #{tpu_custom_call.1} parent=0
    _
  %s4 = ssub.s32 1, %s2
  %s5 = scalar_select 0, %s4, %s2
  $region1: #{tpu_custom_call.1} parent=0
    #allocation2 [shape = 'u8[16384]{0}', space=vmem, size = 0x4000, scoped, tag = 'input window, operand 0']
    #allocation3 [shape = 's32[2]{0}', space=sflag, size = 0x8, scoped, tag = 'scoped memory for tpu_custom_call.1']
    %6 = vsyncpa [#allocation3], 0
    %s7 = scalar_lea.sflag [#allocation3], 1
    %8 = vsyncpa %s7, 0
    loop: start=0, step=1, limit=10
    $region2: #{tpu_custom_call.1} parent=1 // loop_pre_header
      _
    $region3: #{tpu_custom_call.1} parent=1 // loop_header
      %s10 = sphi 0, %s14
      %p11 = scmp.ge.s32.totalorder %s10, 10
      %s17 = sphi 0, %s29
      %s18 = sphi 0, %s25
      %s19 = sphi 0, %s17
      %s20 = sphi 0, %s18
      %s21 = sphi 0, %s19
      %s22 = sphi 0, %s20
      %s34 = sphi 0, %s36
      %s37 = sphi 0, %s34
      %s38 = sphi 0, %s37
      %s54 = sphi 0, %s38
      %s62 = sphi 0, %s64
      %s65 = sphi 0, %s62
      %s66 = sphi 0, %s65
      %s82 = sphi 0, %s66
    $region4: #{tpu_custom_call.1} parent=1 // loop_header_branch
      %13 = sbr.rel (%p11) target = $region8
    $region5: #{tpu_custom_call.1} parent=1 // loop_body
      %s15 = ssub.s32 %s10, 1
      %s16 = ssub.s32 %s10, 2
      %s23 = sadd.s32 1, %s18
      %p24 = scmp.ge.s32.totalorder %s23, 1
      %s25 = scalar_select %p24, 0, %s23
      %s26 = sadd.s32 1, %s17
      %s27 = scalar_select %p24, %s26, %s17
      %p28 = scmp.ge.s32.totalorder %s27, 8
      %s29 = scalar_select %p28, 0, %s27
      %s30 = ssub.s32 %s17, %s29
      %s31 = ssub.s32 %s18, %s25
      %s32 = sor.u32 %s30, %s31
      %p33 = scmp.eq.s32.totalorder %s32, 0
      %s35 = sadd.s32 %s34, 1
      %s36 = scalar_select %p33, %s34, %s35
      %p39 = pneg %p33
      %p40 = scmp.eq.s32.totalorder %s10, 7
      %p41 = por %p39, %p40
      %p42 = scmp.ne.s32.totalorder %s34, %s37
      %p43 = scmp.eq.s32.totalorder %s10, 0
      %p44 = por %p42, %p43
      %p45 = scmp.ne.s32.totalorder %s34, %s37
      %p46 = scmp.eq.s32.totalorder %s15, 7
      %p47 = por %p45, %p46
      %p48 = scmp.ne.s32.totalorder %s37, %s38
      %p49 = scmp.eq.s32.totalorder %s15, 0
      %p50 = por %p48, %p49
      %p51 = scmp.ne.s32.totalorder %s37, %s38
      %p52 = scmp.eq.s32.totalorder %s16, 7
      %p53 = por %p51, %p52
      %p55 = scmp.ne.s32.totalorder %s38, %s54
      %p56 = scmp.eq.s32.totalorder %s16, 0
      %p57 = por %p55, %p56
      %s58 = ssub.s32 %s17, %s29
      %s59 = ssub.s32 %s18, %s25
      %s60 = sor.u32 %s58, %s59
      %p61 = scmp.eq.s32.totalorder %s60, 0
      %s63 = sadd.s32 %s62, 1
      %s64 = scalar_select %p61, %s62, %s63
      %p67 = pneg %p61
      %p68 = scmp.eq.s32.totalorder %s10, 7
      %p69 = por %p67, %p68
      %p70 = scmp.ne.s32.totalorder %s62, %s65
      %p71 = scmp.eq.s32.totalorder %s10, 0
      %p72 = por %p70, %p71
      %p73 = scmp.ne.s32.totalorder %s62, %s65
      %p74 = scmp.eq.s32.totalorder %s15, 7
      %p75 = por %p73, %p74
      %p76 = scmp.ne.s32.totalorder %s65, %s66
      %p77 = scmp.eq.s32.totalorder %s15, 0
      %p78 = por %p76, %p77
      %p79 = scmp.ne.s32.totalorder %s65, %s66
      %p80 = scmp.eq.s32.totalorder %s16, 7
      %p81 = por %p79, %p80
      %p83 = scmp.ne.s32.totalorder %s66, %s82
      %p84 = scmp.eq.s32.totalorder %s16, 0
      %p85 = por %p83, %p84
      %p86 = scmp.le.s32.totalorder 1, %s10
      %p87 = scmp.lt.s32.totalorder %s10, 9
      %p88 = pnand %p86, %p87
      %p89 = pneg %p88
      // Predicated region
      $region9: #{tpu_custom_call.1} parent=5 // pred_check
        _
      $region10: #{tpu_custom_call.1} parent=5 // pred_check_branch
        %91 = sbr.rel (%p88) target = $region12
      $region11: #{tpu_custom_call.1} parent=5 // pred_region
        %s92 = ssub.s32 %s10, 1
      $region12: #{tpu_custom_call.1} parent=5 // pred_fallthru
        _
      %p93 = scmp.lt.s32.totalorder %s10, 8
      // Predicated region
      $region13: #{tpu_custom_call.1} parent=5 // pred_check
        %p94 = pneg %p93
      $region14: #{tpu_custom_call.1} parent=5 // pred_check_branch
        %96 = sbr.rel (%p94) target = $region16
      $region15: #{tpu_custom_call.1} parent=5 // pred_region
        // Predicated region
        $region17: #{tpu_custom_call.1} parent=15 // pred_check
          %p97 = pneg %p44
        $region18: #{tpu_custom_call.1} parent=15 // pred_check_branch
          %99 = sbr.rel (%p97) target = $region20
        $region19: #{tpu_custom_call.1} parent=15 // pred_region
          %s100 = sand.u32 %s34, 1
          %s101 = scalar_lea.sflag [#allocation3], %s100
          %s102 = sand.u32 %s34, 1
          %s103 = smul.addr %s102, 16
          %s104 = scalar_lea.vmem [#allocation2], %s103
          %s105 = smul.u32 2, %s18
          %s107 = ssub.s32 256, 256
          %108 = vsyncadd %s101, %s107
          %s109 = smul.addr %s17, 2
          %s110 = sadd.s32 %s105, %s109
          %s111 = smul.addr %s110, 128
          %s112 = scalar_lea.hbm %s0, %s111
          %s113 = sshll.u32 %s104, 4
          %s114 = int_to_ptr.vmem [resolvable:$true] %s113
          %119 = dma.hbm_to_vmem [thread:$0]  %s112, 256, %s114, %s101, 128, 128, 8
        $region20: #{tpu_custom_call.1} parent=15 // pred_fallthru
          _
      $region16: #{tpu_custom_call.1} parent=5 // pred_fallthru
        _
      %p120 = scmp.le.s32.totalorder 1, %s10
      %p121 = scmp.lt.s32.totalorder %s10, 9
      %p122 = pnand %p120, %p121
      %p123 = pneg %p122
      // Predicated region
      $region21: #{tpu_custom_call.1} parent=5 // pred_check
        _
      $region22: #{tpu_custom_call.1} parent=5 // pred_check_branch
        %125 = sbr.rel (%p122) target = $region24
      $region23: #{tpu_custom_call.1} parent=5 // pred_region
        %s126 = ssub.s32 %s10, 1
        %s127 = sand.u32 %s37, 1
        %s128 = scalar_lea.sflag [#allocation3], %s127
        %s129 = sand.u32 %s37, 1
        %s130 = smul.addr %s129, 16
        %s131 = scalar_lea.vmem [#allocation2], %s130
        // Predicated region
        $region25: #{tpu_custom_call.1} parent=23 // pred_check
          %p132 = pneg %p50
        $region26: #{tpu_custom_call.1} parent=23 // pred_check_branch
          %134 = sbr.rel (%p132) target = $region28
        $region27: #{tpu_custom_call.1} parent=23 // pred_region
          %135 = dma.done %s128, 256
        $region28: #{tpu_custom_call.1} parent=23 // pred_fallthru
          _
        %s136 = sand.u32 %s37, 1
        %s137 = scalar_lea.sflag [#allocation3], %s136
        %s138 = sand.u32 %s37, 1
        %s139 = smul.addr %s138, 16
        %s140 = scalar_lea.vmem [#allocation2], %s139
        %p141 = pneg %p50
        %p142 = pneg %p47
        %p143 = pneg %p78
        %p144 = pneg %p75
        %s145 = smul.u32 2, %s20
        %p146 = scmp.lt.s32.totalorder %s19, 7
        %s147 = scalar_select %p146, %s19, 7
        %p148 = scmp.lt.s32.totalorder %s145, 1
        %s149 = scalar_select %p148, %s145, 1
        %s150 = smul.addr %s149, 4
        %s151 = smul.addr %s147, 8
        %s152 = sadd.s32 %s150, %s151
        %s153 = smul.addr %s152, 4
        %s154 = scalar_lea.vmem %s1, %s153
        %s155 = smul.u32 2, %s20
        %s156 = smul.u32 2, %s20
        %p157 = scmp.lt.s32.totalorder %s19, 7
        %s158 = scalar_select %p157, %s19, 7
        %p159 = scmp.lt.s32.totalorder %s156, 1
        %s160 = scalar_select %p159, %s156, 1
        %s161 = smul.addr %s160, 4
        %s162 = smul.addr %s158, 8
        %s163 = sadd.s32 %s161, %s162
        %s164 = smul.addr %s163, 4
        %s165 = scalar_lea.vmem %s1, %s164
        %s166 = smul.u32 2, %s20
        %v168 = vlaneseq
        %v169 = vshrl.u32 %v168, 7
        %v170 = vlaneseq
        %v171 = vand.u32 %v170, 127
        %v172 = vmul.u32 %v171, 2
        %vm173 = vcmp.eq.s32.totalorder %v169, %v172
        %v174 = vsel %vm173, 1.0, 0.0
        %v175 = vpack.c.bf16 %v174, %v174
        %v176 = vadd.s32 %v172, 1
        %vm177 = vcmp.eq.s32.totalorder %v169, %v176
        %v178 = vsel %vm177, 1.0, 0.0
        %v179 = vpack.c.bf16 %v178, %v178
        %v180 = vmul.u32 %v169, 2
        %vm181 = vcmp.eq.s32.totalorder %v171, %v180
        %v182 = vsel %vm181, 1.0, 0.0
        %v183 = vpack.c.bf16 %v182, %v182
        %v184 = vadd.s32 %v180, 1
        %vm185 = vcmp.eq.s32.totalorder %v171, %v184
        %v186 = vsel %vm185, 1.0, 0.0
        %v187 = vpack.c.bf16 %v186, %v186
        %v188 = vld [vmem:[%s131] sm:$0xff]
        %v189 = vpack.c.bf16 %v188, %v188
        %v190 = vunpack.c.l.bf16 %v189
        %v191 = vsub.f32 %v188, %v190
        %v192 = vpack.c.bf16 %v191, %v191
        %v193 = vunpack.c.l.bf16 %v192
        %v194 = vsub.f32 %v191, %v193
        %v195 = vpack.c.bf16 %v194, %v194
        %vm196 = vcmask 64512
        %v198 = vsel %vm196, %v189, 0
        %vm200 = vcmask 1043456
        %v202 = vsel %vm200, %v175, 0
        %204 = vmatprep.subr.bf16.mxu0 0
        %205 = vmatpush1.bf16.msra.mxu0 %v202
        %206 = vmatprep.subr.bf16.mxu0 0
        %207 = vmatpush1.bf16.msra.mxu0 0
        %208 = vmatprep.subr.bf16.mxu0 0
        %209 = vmatpush1.bf16.msra.mxu0 0
        %210 = vmatprep.subr.bf16.mxu0 0
        %211 = vmatpush1.bf16.msra.mxu0 0
        %212 = vmatprep.subr.bf16.mxu0 0
        %213 = vmatpush1.bf16.msra.mxu0 0
        %214 = vmatprep.subr.bf16.mxu0 0
        %215 = vmatpush1.bf16.msra.mxu0 0
        %216 = vmatprep.subr.bf16.mxu0 0
        %217 = vmatpush1.bf16.msra.mxu0 0
        %218 = vmatprep.subr.bf16.mxu0 0
        %219 = vmatpush1.bf16.msra.mxu0 0
        %220 = vmatprep.subr.bf16.mxu0 0
        %221 = vmatpush1.bf16.msra.mxu0 0
        %222 = vmatprep.subr.bf16.mxu0 0
        %223 = vmatpush1.bf16.msra.mxu0 0
        %224 = vmatprep.subr.bf16.mxu0 0
        %225 = vmatpush1.bf16.msra.mxu0 0
        %226 = vmatprep.subr.bf16.mxu0 0
        %227 = vmatpush1.bf16.msra.mxu0 0
        %228 = vmatprep.subr.bf16.mxu0 0
        %229 = vmatpush1.bf16.msra.mxu0 0
        %230 = vmatprep.subr.bf16.mxu0 0
        %231 = vmatpush1.bf16.msra.mxu0 0
        %232 = vmatprep.subr.bf16.mxu0 0
        %233 = vmatpush1.bf16.msra.mxu0 0
        %234 = vmatprep.subr.bf16.mxu0 0
        %235 = vmatpush1.bf16.msra.mxu0 0
        %236 = vmatprep.mubr.bf16.mxu0 0
        %237 = vmatmul.mubr.bf16.gmra.mrb[0].mxu0 %v198
        %v238 = vpop.f32.mrb[0].mxu0
        %v239 = vadd.f32 0.0, %v238
        %v240 = vpop.f32.mrb[0].mxu0
        %v241 = vpop.f32.mrb[0].mxu0
        %v242 = vpop.f32.mrb[0].mxu0
        %243 = vdwg.mxu0
        %v244 = vpack.c.bf16 %v239, %v239
        %v246 = vsel %vm196, %v192, 0
        %248 = vmatprep.subr.bf16.mxu0 0
        %249 = vmatpush1.bf16.msra.mxu0 %v202
        %250 = vmatprep.subr.bf16.mxu0 0
        %251 = vmatpush1.bf16.msra.mxu0 0
        %252 = vmatprep.subr.bf16.mxu0 0
        %253 = vmatpush1.bf16.msra.mxu0 0
        %254 = vmatprep.subr.bf16.mxu0 0
        %255 = vmatpush1.bf16.msra.mxu0 0
        %256 = vmatprep.subr.bf16.mxu0 0
        %257 = vmatpush1.bf16.msra.mxu0 0
        %258 = vmatprep.subr.bf16.mxu0 0
        %259 = vmatpush1.bf16.msra.mxu0 0
        %260 = vmatprep.subr.bf16.mxu0 0
        %261 = vmatpush1.bf16.msra.mxu0 0
        %262 = vmatprep.subr.bf16.mxu0 0
        %263 = vmatpush1.bf16.msra.mxu0 0
        %264 = vmatprep.subr.bf16.mxu0 0
        %265 = vmatpush1.bf16.msra.mxu0 0
        %266 = vmatprep.subr.bf16.mxu0 0
        %267 = vmatpush1.bf16.msra.mxu0 0
        %268 = vmatprep.subr.bf16.mxu0 0
        %269 = vmatpush1.bf16.msra.mxu0 0
        %270 = vmatprep.subr.bf16.mxu0 0
        %271 = vmatpush1.bf16.msra.mxu0 0
        %272 = vmatprep.subr.bf16.mxu0 0
        %273 = vmatpush1.bf16.msra.mxu0 0
        %274 = vmatprep.subr.bf16.mxu0 0
        %275 = vmatpush1.bf16.msra.mxu0 0
        %276 = vmatprep.subr.bf16.mxu0 0
        %277 = vmatpush1.bf16.msra.mxu0 0
        %278 = vmatprep.subr.bf16.mxu0 0
        %279 = vmatpush1.bf16.msra.mxu0 0
        %280 = vmatprep.mubr.bf16.mxu0 0
        %281 = vmatmul.mubr.bf16.gmra.mrb[0].mxu0 %v246
        %v282 = vpop.f32.mrb[0].mxu0
        %v283 = vadd.f32 0.0, %v282
        %v284 = vpop.f32.mrb[0].mxu0
        %v285 = vpop.f32.mrb[0].mxu0
        %v286 = vpop.f32.mrb[0].mxu0
        %287 = vdwg.mxu0
        %v288 = vpack.c.bf16 %v283, %v283
        %v290 = vsel %vm196, %v195, 0
        %292 = vmatprep.subr.bf16.mxu0 0
        %293 = vmatpush1.bf16.msra.mxu0 %v202
        %294 = vmatprep.subr.bf16.mxu0 0
        %295 = vmatpush1.bf16.msra.mxu0 0
        %296 = vmatprep.subr.bf16.mxu0 0
        %297 = vmatpush1.bf16.msra.mxu0 0
        %298 = vmatprep.subr.bf16.mxu0 0
        %299 = vmatpush1.bf16.msra.mxu0 0
        %300 = vmatprep.subr.bf16.mxu0 0
        %301 = vmatpush1.bf16.msra.mxu0 0
        %302 = vmatprep.subr.bf16.mxu0 0
        %303 = vmatpush1.bf16.msra.mxu0 0
        %304 = vmatprep.subr.bf16.mxu0 0
        %305 = vmatpush1.bf16.msra.mxu0 0
        %306 = vmatprep.subr.bf16.mxu0 0
        %307 = vmatpush1.bf16.msra.mxu0 0
        %308 = vmatprep.subr.bf16.mxu0 0
        %309 = vmatpush1.bf16.msra.mxu0 0
        %310 = vmatprep.subr.bf16.mxu0 0
        %311 = vmatpush1.bf16.msra.mxu0 0
        %312 = vmatprep.subr.bf16.mxu0 0
        %313 = vmatpush1.bf16.msra.mxu0 0
        %314 = vmatprep.subr.bf16.mxu0 0
        %315 = vmatpush1.bf16.msra.mxu0 0
        %316 = vmatprep.subr.bf16.mxu0 0
        %317 = vmatpush1.bf16.msra.mxu0 0
        %318 = vmatprep.subr.bf16.mxu0 0
        %319 = vmatpush1.bf16.msra.mxu0 0
        %320 = vmatprep.subr.bf16.mxu0 0
        %321 = vmatpush1.bf16.msra.mxu0 0
        %322 = vmatprep.subr.bf16.mxu0 0
        %323 = vmatpush1.bf16.msra.mxu0 0
        %324 = vmatprep.mubr.bf16.mxu0 0
        %325 = vmatmul.mubr.bf16.gmra.mrb[0].mxu0 %v290
        %v326 = vpop.f32.mrb[0].mxu0
        %v327 = vadd.f32 0.0, %v326
        %v328 = vpop.f32.mrb[0].mxu0
        %v329 = vpop.f32.mrb[0].mxu0
        %v330 = vpop.f32.mrb[0].mxu0
        %331 = vdwg.mxu0
        %v332 = vpack.c.bf16 %v327, %v327
        %v334 = vsel %vm196, %v183, 0
        %v337 = vsel %vm200, %v332, 0
        %339 = vmatprep.subr.bf16.mxu0 0
        %340 = vmatpush1.bf16.msra.mxu0 %v337
        %341 = vmatprep.subr.bf16.mxu0 0
        %342 = vmatpush1.bf16.msra.mxu0 0
        %343 = vmatprep.subr.bf16.mxu0 0
        %344 = vmatpush1.bf16.msra.mxu0 0
        %345 = vmatprep.subr.bf16.mxu0 0
        %346 = vmatpush1.bf16.msra.mxu0 0
        %347 = vmatprep.subr.bf16.mxu0 0
        %348 = vmatpush1.bf16.msra.mxu0 0
        %349 = vmatprep.subr.bf16.mxu0 0
        %350 = vmatpush1.bf16.msra.mxu0 0
        %351 = vmatprep.subr.bf16.mxu0 0
        %352 = vmatpush1.bf16.msra.mxu0 0
        %353 = vmatprep.subr.bf16.mxu0 0
        %354 = vmatpush1.bf16.msra.mxu0 0
        %355 = vmatprep.subr.bf16.mxu0 0
        %356 = vmatpush1.bf16.msra.mxu0 0
        %357 = vmatprep.subr.bf16.mxu0 0
        %358 = vmatpush1.bf16.msra.mxu0 0
        %359 = vmatprep.subr.bf16.mxu0 0
        %360 = vmatpush1.bf16.msra.mxu0 0
        %361 = vmatprep.subr.bf16.mxu0 0
        %362 = vmatpush1.bf16.msra.mxu0 0
        %363 = vmatprep.subr.bf16.mxu0 0
        %364 = vmatpush1.bf16.msra.mxu0 0
        %365 = vmatprep.subr.bf16.mxu0 0
        %366 = vmatpush1.bf16.msra.mxu0 0
        %367 = vmatprep.subr.bf16.mxu0 0
        %368 = vmatpush1.bf16.msra.mxu0 0
        %369 = vmatprep.subr.bf16.mxu0 0
        %370 = vmatpush1.bf16.msra.mxu0 0
        %371 = vmatprep.mubr.bf16.mxu0 0
        %372 = vmatmul.mubr.bf16.gmra.mrb[0].mxu0 %v334
        %v373 = vpop.f32.mrb[0].mxu0
        %v374 = vadd.f32 0.0, %v373
        %v375 = vpop.f32.mrb[0].mxu0
        %v376 = vpop.f32.mrb[0].mxu0
        %v377 = vpop.f32.mrb[0].mxu0
        %378 = vdwg.mxu0
        %v380 = vsel %vm200, %v288, 0
        %382 = vmatprep.subr.bf16.mxu0 0
        %383 = vmatpush1.bf16.msra.mxu0 %v380
        %384 = vmatprep.subr.bf16.mxu0 0
        %385 = vmatpush1.bf16.msra.mxu0 0
        %386 = vmatprep.subr.bf16.mxu0 0
        %387 = vmatpush1.bf16.msra.mxu0 0
        %388 = vmatprep.subr.bf16.mxu0 0
        %389 = vmatpush1.bf16.msra.mxu0 0
        %390 = vmatprep.subr.bf16.mxu0 0
        %391 = vmatpush1.bf16.msra.mxu0 0
        %392 = vmatprep.subr.bf16.mxu0 0
        %393 = vmatpush1.bf16.msra.mxu0 0
        %394 = vmatprep.subr.bf16.mxu0 0
        %395 = vmatpush1.bf16.msra.mxu0 0
        %396 = vmatprep.subr.bf16.mxu0 0
        %397 = vmatpush1.bf16.msra.mxu0 0
        %398 = vmatprep.subr.bf16.mxu0 0
        %399 = vmatpush1.bf16.msra.mxu0 0
        %400 = vmatprep.subr.bf16.mxu0 0
        %401 = vmatpush1.bf16.msra.mxu0 0
        %402 = vmatprep.subr.bf16.mxu0 0
        %403 = vmatpush1.bf16.msra.mxu0 0
        %404 = vmatprep.subr.bf16.mxu0 0
        %405 = vmatpush1.bf16.msra.mxu0 0
        %406 = vmatprep.subr.bf16.mxu0 0
        %407 = vmatpush1.bf16.msra.mxu0 0
        %408 = vmatprep.subr.bf16.mxu0 0
        %409 = vmatpush1.bf16.msra.mxu0 0
        %410 = vmatprep.subr.bf16.mxu0 0
        %411 = vmatpush1.bf16.msra.mxu0 0
        %412 = vmatprep.subr.bf16.mxu0 0
        %413 = vmatpush1.bf16.msra.mxu0 0
        %414 = vmatprep.mubr.bf16.mxu0 0
        %415 = vmatmul.mubr.bf16.gmra.mrb[0].mxu0 %v334
        %v416 = vpop.f32.mrb[0].mxu0
        %v417 = vadd.f32 %v374, %v416
        %v418 = vpop.f32.mrb[0].mxu0
        %v419 = vpop.f32.mrb[0].mxu0
        %v420 = vpop.f32.mrb[0].mxu0
        %421 = vdwg.mxu0
        %v423 = vsel %vm200, %v244, 0
        %425 = vmatprep.subr.bf16.mxu0 0
        %426 = vmatpush1.bf16.msra.mxu0 %v423
        %427 = vmatprep.subr.bf16.mxu0 0
        %428 = vmatpush1.bf16.msra.mxu0 0
        %429 = vmatprep.subr.bf16.mxu0 0
        %430 = vmatpush1.bf16.msra.mxu0 0
        %431 = vmatprep.subr.bf16.mxu0 0
        %432 = vmatpush1.bf16.msra.mxu0 0
        %433 = vmatprep.subr.bf16.mxu0 0
        %434 = vmatpush1.bf16.msra.mxu0 0
        %435 = vmatprep.subr.bf16.mxu0 0
        %436 = vmatpush1.bf16.msra.mxu0 0
        %437 = vmatprep.subr.bf16.mxu0 0
        %438 = vmatpush1.bf16.msra.mxu0 0
        %439 = vmatprep.subr.bf16.mxu0 0
        %440 = vmatpush1.bf16.msra.mxu0 0
        %441 = vmatprep.subr.bf16.mxu0 0
        %442 = vmatpush1.bf16.msra.mxu0 0
        %443 = vmatprep.subr.bf16.mxu0 0
        %444 = vmatpush1.bf16.msra.mxu0 0
        %445 = vmatprep.subr.bf16.mxu0 0
        %446 = vmatpush1.bf16.msra.mxu0 0
        %447 = vmatprep.subr.bf16.mxu0 0
        %448 = vmatpush1.bf16.msra.mxu0 0
        %449 = vmatprep.subr.bf16.mxu0 0
        %450 = vmatpush1.bf16.msra.mxu0 0
        %451 = vmatprep.subr.bf16.mxu0 0
        %452 = vmatpush1.bf16.msra.mxu0 0
        %453 = vmatprep.subr.bf16.mxu0 0
        %454 = vmatpush1.bf16.msra.mxu0 0
        %455 = vmatprep.subr.bf16.mxu0 0
        %456 = vmatpush1.bf16.msra.mxu0 0
        %457 = vmatprep.mubr.bf16.mxu0 0
        %458 = vmatmul.mubr.bf16.gmra.mrb[0].mxu0 %v334
        %v459 = vpop.f32.mrb[0].mxu0
        %v460 = vadd.f32 %v417, %v459
        %v461 = vpop.f32.mrb[0].mxu0
        %v462 = vpop.f32.mrb[0].mxu0
        %v463 = vpop.f32.mrb[0].mxu0
        %464 = vdwg.mxu0
        %vm465 = vcmask 27648
        %466 = vst.msk [vmem:[%s165] sm:$0xf] %vm465, %v460
        %v468 = vsel %vm196, %v187, 0
        %470 = vmatprep.subr.bf16.mxu0 0
        %471 = vmatpush1.bf16.msra.mxu0 %v337
        %472 = vmatprep.subr.bf16.mxu0 0
        %473 = vmatpush1.bf16.msra.mxu0 0
        %474 = vmatprep.subr.bf16.mxu0 0
        %475 = vmatpush1.bf16.msra.mxu0 0
        %476 = vmatprep.subr.bf16.mxu0 0
        %477 = vmatpush1.bf16.msra.mxu0 0
        %478 = vmatprep.subr.bf16.mxu0 0
        %479 = vmatpush1.bf16.msra.mxu0 0
        %480 = vmatprep.subr.bf16.mxu0 0
        %481 = vmatpush1.bf16.msra.mxu0 0
        %482 = vmatprep.subr.bf16.mxu0 0
        %483 = vmatpush1.bf16.msra.mxu0 0
        %484 = vmatprep.subr.bf16.mxu0 0
        %485 = vmatpush1.bf16.msra.mxu0 0
        %486 = vmatprep.subr.bf16.mxu0 0
        %487 = vmatpush1.bf16.msra.mxu0 0
        %488 = vmatprep.subr.bf16.mxu0 0
        %489 = vmatpush1.bf16.msra.mxu0 0
        %490 = vmatprep.subr.bf16.mxu0 0
        %491 = vmatpush1.bf16.msra.mxu0 0
        %492 = vmatprep.subr.bf16.mxu0 0
        %493 = vmatpush1.bf16.msra.mxu0 0
        %494 = vmatprep.subr.bf16.mxu0 0
        %495 = vmatpush1.bf16.msra.mxu0 0
        %496 = vmatprep.subr.bf16.mxu0 0
        %497 = vmatpush1.bf16.msra.mxu0 0
        %498 = vmatprep.subr.bf16.mxu0 0
        %499 = vmatpush1.bf16.msra.mxu0 0
        %500 = vmatprep.subr.bf16.mxu0 0
        %501 = vmatpush1.bf16.msra.mxu0 0
        %502 = vmatprep.mubr.bf16.mxu0 0
        %503 = vmatmul.mubr.bf16.gmra.mrb[0].mxu0 %v468
        %v504 = vpop.f32.mrb[0].mxu0
        %v505 = vadd.f32 0.0, %v504
        %v506 = vpop.f32.mrb[0].mxu0
        %v507 = vpop.f32.mrb[0].mxu0
        %v508 = vpop.f32.mrb[0].mxu0
        %509 = vdwg.mxu0
        %510 = vmatprep.subr.bf16.mxu0 0
        %511 = vmatpush1.bf16.msra.mxu0 %v380
        %512 = vmatprep.subr.bf16.mxu0 0
        %513 = vmatpush1.bf16.msra.mxu0 0
        %514 = vmatprep.subr.bf16.mxu0 0
        %515 = vmatpush1.bf16.msra.mxu0 0
        %516 = vmatprep.subr.bf16.mxu0 0
        %517 = vmatpush1.bf16.msra.mxu0 0
        %518 = vmatprep.subr.bf16.mxu0 0
        %519 = vmatpush1.bf16.msra.mxu0 0
        %520 = vmatprep.subr.bf16.mxu0 0
        %521 = vmatpush1.bf16.msra.mxu0 0
        %522 = vmatprep.subr.bf16.mxu0 0
        %523 = vmatpush1.bf16.msra.mxu0 0
        %524 = vmatprep.subr.bf16.mxu0 0
        %525 = vmatpush1.bf16.msra.mxu0 0
        %526 = vmatprep.subr.bf16.mxu0 0
        %527 = vmatpush1.bf16.msra.mxu0 0
        %528 = vmatprep.subr.bf16.mxu0 0
        %529 = vmatpush1.bf16.msra.mxu0 0
        %530 = vmatprep.subr.bf16.mxu0 0
        %531 = vmatpush1.bf16.msra.mxu0 0
        %532 = vmatprep.subr.bf16.mxu0 0
        %533 = vmatpush1.bf16.msra.mxu0 0
        %534 = vmatprep.subr.bf16.mxu0 0
        %535 = vmatpush1.bf16.msra.mxu0 0
        %536 = vmatprep.subr.bf16.mxu0 0
        %537 = vmatpush1.bf16.msra.mxu0 0
        %538 = vmatprep.subr.bf16.mxu0 0
        %539 = vmatpush1.bf16.msra.mxu0 0
        %540 = vmatprep.subr.bf16.mxu0 0
        %541 = vmatpush1.bf16.msra.mxu0 0
        %542 = vmatprep.mubr.bf16.mxu0 0
        %543 = vmatmul.mubr.bf16.gmra.mrb[0].mxu0 %v468
        %v544 = vpop.f32.mrb[0].mxu0
        %v545 = vadd.f32 %v505, %v544
        %v546 = vpop.f32.mrb[0].mxu0
        %v547 = vpop.f32.mrb[0].mxu0
        %v548 = vpop.f32.mrb[0].mxu0
        %549 = vdwg.mxu0
        %550 = vmatprep.subr.bf16.mxu0 0
        %551 = vmatpush1.bf16.msra.mxu0 %v423
        %552 = vmatprep.subr.bf16.mxu0 0
        %553 = vmatpush1.bf16.msra.mxu0 0
        %554 = vmatprep.subr.bf16.mxu0 0
        %555 = vmatpush1.bf16.msra.mxu0 0
        %556 = vmatprep.subr.bf16.mxu0 0
        %557 = vmatpush1.bf16.msra.mxu0 0
        %558 = vmatprep.subr.bf16.mxu0 0
        %559 = vmatpush1.bf16.msra.mxu0 0
        %560 = vmatprep.subr.bf16.mxu0 0
        %561 = vmatpush1.bf16.msra.mxu0 0
        %562 = vmatprep.subr.bf16.mxu0 0
        %563 = vmatpush1.bf16.msra.mxu0 0
        %564 = vmatprep.subr.bf16.mxu0 0
        %565 = vmatpush1.bf16.msra.mxu0 0
        %566 = vmatprep.subr.bf16.mxu0 0
        %567 = vmatpush1.bf16.msra.mxu0 0
        %568 = vmatprep.subr.bf16.mxu0 0
        %569 = vmatpush1.bf16.msra.mxu0 0
        %570 = vmatprep.subr.bf16.mxu0 0
        %571 = vmatpush1.bf16.msra.mxu0 0
        %572 = vmatprep.subr.bf16.mxu0 0
        %573 = vmatpush1.bf16.msra.mxu0 0
        %574 = vmatprep.subr.bf16.mxu0 0
        %575 = vmatpush1.bf16.msra.mxu0 0
        %576 = vmatprep.subr.bf16.mxu0 0
        %577 = vmatpush1.bf16.msra.mxu0 0
        %578 = vmatprep.subr.bf16.mxu0 0
        %579 = vmatpush1.bf16.msra.mxu0 0
        %580 = vmatprep.subr.bf16.mxu0 0
        %581 = vmatpush1.bf16.msra.mxu0 0
        %582 = vmatprep.mubr.bf16.mxu0 0
        %583 = vmatmul.mubr.bf16.gmra.mrb[0].mxu0 %v468
        %v584 = vpop.f32.mrb[0].mxu0
        %v585 = vadd.f32 %v545, %v584
        %v586 = vpop.f32.mrb[0].mxu0
        %v587 = vpop.f32.mrb[0].mxu0
        %v588 = vpop.f32.mrb[0].mxu0
        %589 = vdwg.mxu0
        %s590 = scalar_lea.vmem %s165, 8
        %591 = vst.msk [vmem:[%s590] sm:$0xf] %vm465, %v585
        %v593 = vsel %vm200, %v179, 0
        %595 = vmatprep.subr.bf16.mxu0 0
        %596 = vmatpush1.bf16.msra.mxu0 %v593
        %597 = vmatprep.subr.bf16.mxu0 0
        %598 = vmatpush1.bf16.msra.mxu0 0
        %599 = vmatprep.subr.bf16.mxu0 0
        %600 = vmatpush1.bf16.msra.mxu0 0
        %601 = vmatprep.subr.bf16.mxu0 0
        %602 = vmatpush1.bf16.msra.mxu0 0
        %603 = vmatprep.subr.bf16.mxu0 0
        %604 = vmatpush1.bf16.msra.mxu0 0
        %605 = vmatprep.subr.bf16.mxu0 0
        %606 = vmatpush1.bf16.msra.mxu0 0
        %607 = vmatprep.subr.bf16.mxu0 0
        %608 = vmatpush1.bf16.msra.mxu0 0
        %609 = vmatprep.subr.bf16.mxu0 0
        %610 = vmatpush1.bf16.msra.mxu0 0
        %611 = vmatprep.subr.bf16.mxu0 0
        %612 = vmatpush1.bf16.msra.mxu0 0
        %613 = vmatprep.subr.bf16.mxu0 0
        %614 = vmatpush1.bf16.msra.mxu0 0
        %615 = vmatprep.subr.bf16.mxu0 0
        %616 = vmatpush1.bf16.msra.mxu0 0
        %617 = vmatprep.subr.bf16.mxu0 0
        %618 = vmatpush1.bf16.msra.mxu0 0
        %619 = vmatprep.subr.bf16.mxu0 0
        %620 = vmatpush1.bf16.msra.mxu0 0
        %621 = vmatprep.subr.bf16.mxu0 0
        %622 = vmatpush1.bf16.msra.mxu0 0
        %623 = vmatprep.subr.bf16.mxu0 0
        %624 = vmatpush1.bf16.msra.mxu0 0
        %625 = vmatprep.subr.bf16.mxu0 0
        %626 = vmatpush1.bf16.msra.mxu0 0
        %627 = vmatprep.mubr.bf16.mxu0 0
        %628 = vmatmul.mubr.bf16.gmra.mrb[0].mxu0 %v198
        %v629 = vpop.f32.mrb[0].mxu0
        %v630 = vadd.f32 0.0, %v629
        %v631 = vpop.f32.mrb[0].mxu0
        %v632 = vpop.f32.mrb[0].mxu0
        %v633 = vpop.f32.mrb[0].mxu0
        %634 = vdwg.mxu0
        %v635 = vpack.c.bf16 %v630, %v630
        %636 = vmatprep.subr.bf16.mxu0 0
        %637 = vmatpush1.bf16.msra.mxu0 %v593
        %638 = vmatprep.subr.bf16.mxu0 0
        %639 = vmatpush1.bf16.msra.mxu0 0
        %640 = vmatprep.subr.bf16.mxu0 0
        %641 = vmatpush1.bf16.msra.mxu0 0
        %642 = vmatprep.subr.bf16.mxu0 0
        %643 = vmatpush1.bf16.msra.mxu0 0
        %644 = vmatprep.subr.bf16.mxu0 0
        %645 = vmatpush1.bf16.msra.mxu0 0
        %646 = vmatprep.subr.bf16.mxu0 0
        %647 = vmatpush1.bf16.msra.mxu0 0
        %648 = vmatprep.subr.bf16.mxu0 0
        %649 = vmatpush1.bf16.msra.mxu0 0
        %650 = vmatprep.subr.bf16.mxu0 0
        %651 = vmatpush1.bf16.msra.mxu0 0
        %652 = vmatprep.subr.bf16.mxu0 0
        %653 = vmatpush1.bf16.msra.mxu0 0
        %654 = vmatprep.subr.bf16.mxu0 0
        %655 = vmatpush1.bf16.msra.mxu0 0
        %656 = vmatprep.subr.bf16.mxu0 0
        %657 = vmatpush1.bf16.msra.mxu0 0
        %658 = vmatprep.subr.bf16.mxu0 0
        %659 = vmatpush1.bf16.msra.mxu0 0
        %660 = vmatprep.subr.bf16.mxu0 0
        %661 = vmatpush1.bf16.msra.mxu0 0
        %662 = vmatprep.subr.bf16.mxu0 0
        %663 = vmatpush1.bf16.msra.mxu0 0
        %664 = vmatprep.subr.bf16.mxu0 0
        %665 = vmatpush1.bf16.msra.mxu0 0
        %666 = vmatprep.subr.bf16.mxu0 0
        %667 = vmatpush1.bf16.msra.mxu0 0
        %668 = vmatprep.mubr.bf16.mxu0 0
        %669 = vmatmul.mubr.bf16.gmra.mrb[0].mxu0 %v246
        %v670 = vpop.f32.mrb[0].mxu0
        %v671 = vadd.f32 0.0, %v670
        %v672 = vpop.f32.mrb[0].mxu0
        %v673 = vpop.f32.mrb[0].mxu0
        %v674 = vpop.f32.mrb[0].mxu0
        %675 = vdwg.mxu0
        %v676 = vpack.c.bf16 %v671, %v671
        %677 = vmatprep.subr.bf16.mxu0 0
        %678 = vmatpush1.bf16.msra.mxu0 %v593
        %679 = vmatprep.subr.bf16.mxu0 0
        %680 = vmatpush1.bf16.msra.mxu0 0
        %681 = vmatprep.subr.bf16.mxu0 0
        %682 = vmatpush1.bf16.msra.mxu0 0
        %683 = vmatprep.subr.bf16.mxu0 0
        %684 = vmatpush1.bf16.msra.mxu0 0
        %685 = vmatprep.subr.bf16.mxu0 0
        %686 = vmatpush1.bf16.msra.mxu0 0
        %687 = vmatprep.subr.bf16.mxu0 0
        %688 = vmatpush1.bf16.msra.mxu0 0
        %689 = vmatprep.subr.bf16.mxu0 0
        %690 = vmatpush1.bf16.msra.mxu0 0
        %691 = vmatprep.subr.bf16.mxu0 0
        %692 = vmatpush1.bf16.msra.mxu0 0
        %693 = vmatprep.subr.bf16.mxu0 0
        %694 = vmatpush1.bf16.msra.mxu0 0
        %695 = vmatprep.subr.bf16.mxu0 0
        %696 = vmatpush1.bf16.msra.mxu0 0
        %697 = vmatprep.subr.bf16.mxu0 0
        %698 = vmatpush1.bf16.msra.mxu0 0
        %699 = vmatprep.subr.bf16.mxu0 0
        %700 = vmatpush1.bf16.msra.mxu0 0
        %701 = vmatprep.subr.bf16.mxu0 0
        %702 = vmatpush1.bf16.msra.mxu0 0
        %703 = vmatprep.subr.bf16.mxu0 0
        %704 = vmatpush1.bf16.msra.mxu0 0
        %705 = vmatprep.subr.bf16.mxu0 0
        %706 = vmatpush1.bf16.msra.mxu0 0
        %707 = vmatprep.subr.bf16.mxu0 0
        %708 = vmatpush1.bf16.msra.mxu0 0
        %709 = vmatprep.mubr.bf16.mxu0 0
        %710 = vmatmul.mubr.bf16.gmra.mrb[0].mxu0 %v290
        %v711 = vpop.f32.mrb[0].mxu0
        %v712 = vadd.f32 0.0, %v711
        %v713 = vpop.f32.mrb[0].mxu0
        %v714 = vpop.f32.mrb[0].mxu0
        %v715 = vpop.f32.mrb[0].mxu0
        %716 = vdwg.mxu0
        %v717 = vpack.c.bf16 %v712, %v712
        %v719 = vsel %vm200, %v717, 0
        %721 = vmatprep.subr.bf16.mxu0 0
        %722 = vmatpush1.bf16.msra.mxu0 %v719
        %723 = vmatprep.subr.bf16.mxu0 0
        %724 = vmatpush1.bf16.msra.mxu0 0
        %725 = vmatprep.subr.bf16.mxu0 0
        %726 = vmatpush1.bf16.msra.mxu0 0
        %727 = vmatprep.subr.bf16.mxu0 0
        %728 = vmatpush1.bf16.msra.mxu0 0
        %729 = vmatprep.subr.bf16.mxu0 0
        %730 = vmatpush1.bf16.msra.mxu0 0
        %731 = vmatprep.subr.bf16.mxu0 0
        %732 = vmatpush1.bf16.msra.mxu0 0
        %733 = vmatprep.subr.bf16.mxu0 0
        %734 = vmatpush1.bf16.msra.mxu0 0
        %735 = vmatprep.subr.bf16.mxu0 0
        %736 = vmatpush1.bf16.msra.mxu0 0
        %737 = vmatprep.subr.bf16.mxu0 0
        %738 = vmatpush1.bf16.msra.mxu0 0
        %739 = vmatprep.subr.bf16.mxu0 0
        %740 = vmatpush1.bf16.msra.mxu0 0
        %741 = vmatprep.subr.bf16.mxu0 0
        %742 = vmatpush1.bf16.msra.mxu0 0
        %743 = vmatprep.subr.bf16.mxu0 0
        %744 = vmatpush1.bf16.msra.mxu0 0
        %745 = vmatprep.subr.bf16.mxu0 0
        %746 = vmatpush1.bf16.msra.mxu0 0
        %747 = vmatprep.subr.bf16.mxu0 0
        %748 = vmatpush1.bf16.msra.mxu0 0
        %749 = vmatprep.subr.bf16.mxu0 0
        %750 = vmatpush1.bf16.msra.mxu0 0
        %751 = vmatprep.subr.bf16.mxu0 0
        %752 = vmatpush1.bf16.msra.mxu0 0
        %753 = vmatprep.mubr.bf16.mxu0 0
        %754 = vmatmul.mubr.bf16.gmra.mrb[0].mxu0 %v334
        %v755 = vpop.f32.mrb[0].mxu0
        %v756 = vadd.f32 0.0, %v755
        %v757 = vpop.f32.mrb[0].mxu0
        %v758 = vpop.f32.mrb[0].mxu0
        %v759 = vpop.f32.mrb[0].mxu0
        %760 = vdwg.mxu0
        %v762 = vsel %vm200, %v676, 0
        %764 = vmatprep.subr.bf16.mxu0 0
        %765 = vmatpush1.bf16.msra.mxu0 %v762
        %766 = vmatprep.subr.bf16.mxu0 0
        %767 = vmatpush1.bf16.msra.mxu0 0
        %768 = vmatprep.subr.bf16.mxu0 0
        %769 = vmatpush1.bf16.msra.mxu0 0
        %770 = vmatprep.subr.bf16.mxu0 0
        %771 = vmatpush1.bf16.msra.mxu0 0
        %772 = vmatprep.subr.bf16.mxu0 0
        %773 = vmatpush1.bf16.msra.mxu0 0
        %774 = vmatprep.subr.bf16.mxu0 0
        %775 = vmatpush1.bf16.msra.mxu0 0
        %776 = vmatprep.subr.bf16.mxu0 0
        %777 = vmatpush1.bf16.msra.mxu0 0
        %778 = vmatprep.subr.bf16.mxu0 0
        %779 = vmatpush1.bf16.msra.mxu0 0
        %780 = vmatprep.subr.bf16.mxu0 0
        %781 = vmatpush1.bf16.msra.mxu0 0
        %782 = vmatprep.subr.bf16.mxu0 0
        %783 = vmatpush1.bf16.msra.mxu0 0
        %784 = vmatprep.subr.bf16.mxu0 0
        %785 = vmatpush1.bf16.msra.mxu0 0
        %786 = vmatprep.subr.bf16.mxu0 0
        %787 = vmatpush1.bf16.msra.mxu0 0
        %788 = vmatprep.subr.bf16.mxu0 0
        %789 = vmatpush1.bf16.msra.mxu0 0
        %790 = vmatprep.subr.bf16.mxu0 0
        %791 = vmatpush1.bf16.msra.mxu0 0
        %792 = vmatprep.subr.bf16.mxu0 0
        %793 = vmatpush1.bf16.msra.mxu0 0
        %794 = vmatprep.subr.bf16.mxu0 0
        %795 = vmatpush1.bf16.msra.mxu0 0
        %796 = vmatprep.mubr.bf16.mxu0 0
        %797 = vmatmul.mubr.bf16.gmra.mrb[0].mxu0 %v334
        %v798 = vpop.f32.mrb[0].mxu0
        %v799 = vadd.f32 %v756, %v798
        %v800 = vpop.f32.mrb[0].mxu0
        %v801 = vpop.f32.mrb[0].mxu0
        %v802 = vpop.f32.mrb[0].mxu0
        %803 = vdwg.mxu0
        %v805 = vsel %vm200, %v635, 0
        %807 = vmatprep.subr.bf16.mxu0 0
        %808 = vmatpush1.bf16.msra.mxu0 %v805
        %809 = vmatprep.subr.bf16.mxu0 0
        %810 = vmatpush1.bf16.msra.mxu0 0
        %811 = vmatprep.subr.bf16.mxu0 0
        %812 = vmatpush1.bf16.msra.mxu0 0
        %813 = vmatprep.subr.bf16.mxu0 0
        %814 = vmatpush1.bf16.msra.mxu0 0
        %815 = vmatprep.subr.bf16.mxu0 0
        %816 = vmatpush1.bf16.msra.mxu0 0
        %817 = vmatprep.subr.bf16.mxu0 0
        %818 = vmatpush1.bf16.msra.mxu0 0
        %819 = vmatprep.subr.bf16.mxu0 0
        %820 = vmatpush1.bf16.msra.mxu0 0
        %821 = vmatprep.subr.bf16.mxu0 0
        %822 = vmatpush1.bf16.msra.mxu0 0
        %823 = vmatprep.subr.bf16.mxu0 0
        %824 = vmatpush1.bf16.msra.mxu0 0
        %825 = vmatprep.subr.bf16.mxu0 0
        %826 = vmatpush1.bf16.msra.mxu0 0
        %827 = vmatprep.subr.bf16.mxu0 0
        %828 = vmatpush1.bf16.msra.mxu0 0
        %829 = vmatprep.subr.bf16.mxu0 0
        %830 = vmatpush1.bf16.msra.mxu0 0
        %831 = vmatprep.subr.bf16.mxu0 0
        %832 = vmatpush1.bf16.msra.mxu0 0
        %833 = vmatprep.subr.bf16.mxu0 0
        %834 = vmatpush1.bf16.msra.mxu0 0
        %835 = vmatprep.subr.bf16.mxu0 0
        %836 = vmatpush1.bf16.msra.mxu0 0
        %837 = vmatprep.subr.bf16.mxu0 0
        %838 = vmatpush1.bf16.msra.mxu0 0
        %839 = vmatprep.mubr.bf16.mxu0 0
        %840 = vmatmul.mubr.bf16.gmra.mrb[0].mxu0 %v334
        %v841 = vpop.f32.mrb[0].mxu0
        %v842 = vadd.f32 %v799, %v841
        %v843 = vpop.f32.mrb[0].mxu0
        %v844 = vpop.f32.mrb[0].mxu0
        %v845 = vpop.f32.mrb[0].mxu0
        %846 = vdwg.mxu0
        %s847 = scalar_lea.vmem %s165, 4
        %848 = vst.msk [vmem:[%s847] sm:$0xf] %vm465, %v842
        %849 = vmatprep.subr.bf16.mxu0 0
        %850 = vmatpush1.bf16.msra.mxu0 %v719
        %851 = vmatprep.subr.bf16.mxu0 0
        %852 = vmatpush1.bf16.msra.mxu0 0
        %853 = vmatprep.subr.bf16.mxu0 0
        %854 = vmatpush1.bf16.msra.mxu0 0
        %855 = vmatprep.subr.bf16.mxu0 0
        %856 = vmatpush1.bf16.msra.mxu0 0
        %857 = vmatprep.subr.bf16.mxu0 0
        %858 = vmatpush1.bf16.msra.mxu0 0
        %859 = vmatprep.subr.bf16.mxu0 0
        %860 = vmatpush1.bf16.msra.mxu0 0
        %861 = vmatprep.subr.bf16.mxu0 0
        %862 = vmatpush1.bf16.msra.mxu0 0
        %863 = vmatprep.subr.bf16.mxu0 0
        %864 = vmatpush1.bf16.msra.mxu0 0
        %865 = vmatprep.subr.bf16.mxu0 0
        %866 = vmatpush1.bf16.msra.mxu0 0
        %867 = vmatprep.subr.bf16.mxu0 0
        %868 = vmatpush1.bf16.msra.mxu0 0
        %869 = vmatprep.subr.bf16.mxu0 0
        %870 = vmatpush1.bf16.msra.mxu0 0
        %871 = vmatprep.subr.bf16.mxu0 0
        %872 = vmatpush1.bf16.msra.mxu0 0
        %873 = vmatprep.subr.bf16.mxu0 0
        %874 = vmatpush1.bf16.msra.mxu0 0
        %875 = vmatprep.subr.bf16.mxu0 0
        %876 = vmatpush1.bf16.msra.mxu0 0
        %877 = vmatprep.subr.bf16.mxu0 0
        %878 = vmatpush1.bf16.msra.mxu0 0
        %879 = vmatprep.subr.bf16.mxu0 0
        %880 = vmatpush1.bf16.msra.mxu0 0
        %881 = vmatprep.mubr.bf16.mxu0 0
        %882 = vmatmul.mubr.bf16.gmra.mrb[0].mxu0 %v468
        %v883 = vpop.f32.mrb[0].mxu0
        %v884 = vadd.f32 0.0, %v883
        %v885 = vpop.f32.mrb[0].mxu0
        %v886 = vpop.f32.mrb[0].mxu0
        %v887 = vpop.f32.mrb[0].mxu0
        %888 = vdwg.mxu0
        %889 = vmatprep.subr.bf16.mxu0 0
        %890 = vmatpush1.bf16.msra.mxu0 %v762
        %891 = vmatprep.subr.bf16.mxu0 0
        %892 = vmatpush1.bf16.msra.mxu0 0
        %893 = vmatprep.subr.bf16.mxu0 0
        %894 = vmatpush1.bf16.msra.mxu0 0
        %895 = vmatprep.subr.bf16.mxu0 0
        %896 = vmatpush1.bf16.msra.mxu0 0
        %897 = vmatprep.subr.bf16.mxu0 0
        %898 = vmatpush1.bf16.msra.mxu0 0
        %899 = vmatprep.subr.bf16.mxu0 0
        %900 = vmatpush1.bf16.msra.mxu0 0
        %901 = vmatprep.subr.bf16.mxu0 0
        %902 = vmatpush1.bf16.msra.mxu0 0
        %903 = vmatprep.subr.bf16.mxu0 0
        %904 = vmatpush1.bf16.msra.mxu0 0
        %905 = vmatprep.subr.bf16.mxu0 0
        %906 = vmatpush1.bf16.msra.mxu0 0
        %907 = vmatprep.subr.bf16.mxu0 0
        %908 = vmatpush1.bf16.msra.mxu0 0
        %909 = vmatprep.subr.bf16.mxu0 0
        %910 = vmatpush1.bf16.msra.mxu0 0
        %911 = vmatprep.subr.bf16.mxu0 0
        %912 = vmatpush1.bf16.msra.mxu0 0
        %913 = vmatprep.subr.bf16.mxu0 0
        %914 = vmatpush1.bf16.msra.mxu0 0
        %915 = vmatprep.subr.bf16.mxu0 0
        %916 = vmatpush1.bf16.msra.mxu0 0
        %917 = vmatprep.subr.bf16.mxu0 0
        %918 = vmatpush1.bf16.msra.mxu0 0
        %919 = vmatprep.subr.bf16.mxu0 0
        %920 = vmatpush1.bf16.msra.mxu0 0
        %921 = vmatprep.mubr.bf16.mxu0 0
        %922 = vmatmul.mubr.bf16.gmra.mrb[0].mxu0 %v468
        %v923 = vpop.f32.mrb[0].mxu0
        %v924 = vadd.f32 %v884, %v923
        %v925 = vpop.f32.mrb[0].mxu0
        %v926 = vpop.f32.mrb[0].mxu0
        %v927 = vpop.f32.mrb[0].mxu0
        %928 = vdwg.mxu0
        %929 = vmatprep.subr.bf16.mxu0 0
        %930 = vmatpush1.bf16.msra.mxu0 %v805
        %931 = vmatprep.subr.bf16.mxu0 0
        %932 = vmatpush1.bf16.msra.mxu0 0
        %933 = vmatprep.subr.bf16.mxu0 0
        %934 = vmatpush1.bf16.msra.mxu0 0
        %935 = vmatprep.subr.bf16.mxu0 0
        %936 = vmatpush1.bf16.msra.mxu0 0
        %937 = vmatprep.subr.bf16.mxu0 0
        %938 = vmatpush1.bf16.msra.mxu0 0
        %939 = vmatprep.subr.bf16.mxu0 0
        %940 = vmatpush1.bf16.msra.mxu0 0
        %941 = vmatprep.subr.bf16.mxu0 0
        %942 = vmatpush1.bf16.msra.mxu0 0
        %943 = vmatprep.subr.bf16.mxu0 0
        %944 = vmatpush1.bf16.msra.mxu0 0
        %945 = vmatprep.subr.bf16.mxu0 0
        %946 = vmatpush1.bf16.msra.mxu0 0
        %947 = vmatprep.subr.bf16.mxu0 0
        %948 = vmatpush1.bf16.msra.mxu0 0
        %949 = vmatprep.subr.bf16.mxu0 0
        %950 = vmatpush1.bf16.msra.mxu0 0
        %951 = vmatprep.subr.bf16.mxu0 0
        %952 = vmatpush1.bf16.msra.mxu0 0
        %953 = vmatprep.subr.bf16.mxu0 0
        %954 = vmatpush1.bf16.msra.mxu0 0
        %955 = vmatprep.subr.bf16.mxu0 0
        %956 = vmatpush1.bf16.msra.mxu0 0
        %957 = vmatprep.subr.bf16.mxu0 0
        %958 = vmatpush1.bf16.msra.mxu0 0
        %959 = vmatprep.subr.bf16.mxu0 0
        %960 = vmatpush1.bf16.msra.mxu0 0
        %961 = vmatprep.mubr.bf16.mxu0 0
        %962 = vmatmul.mubr.bf16.gmra.mrb[0].mxu0 %v468
        %v963 = vpop.f32.mrb[0].mxu0
        %v964 = vadd.f32 %v924, %v963
        %v965 = vpop.f32.mrb[0].mxu0
        %v966 = vpop.f32.mrb[0].mxu0
        %v967 = vpop.f32.mrb[0].mxu0
        %968 = vdwg.mxu0
        %s969 = scalar_lea.vmem %s165, 12
        %970 = vst.msk [vmem:[%s969] sm:$0xf] %vm465, %v964
        %s971 = scalar_lea.vmem %s131, 8 [#allocation2]
        %v972 = vld [vmem:[%s971] sm:$0xff]
        %v973 = vpack.c.bf16 %v972, %v972
        %v974 = vunpack.c.l.bf16 %v973
        %v975 = vsub.f32 %v972, %v974
        %v976 = vpack.c.bf16 %v975, %v975
        %v977 = vunpack.c.l.bf16 %v976
        %v978 = vsub.f32 %v975, %v977
        %v979 = vpack.c.bf16 %v978, %v978
        %v981 = vsel %vm196, %v973, 0
        %983 = vmatprep.subr.bf16.mxu0 0
        %984 = vmatpush1.bf16.msra.mxu0 %v202
        %985 = vmatprep.subr.bf16.mxu0 0
        %986 = vmatpush1.bf16.msra.mxu0 0
        %987 = vmatprep.subr.bf16.mxu0 0
        %988 = vmatpush1.bf16.msra.mxu0 0
        %989 = vmatprep.subr.bf16.mxu0 0
        %990 = vmatpush1.bf16.msra.mxu0 0
        %991 = vmatprep.subr.bf16.mxu0 0
        %992 = vmatpush1.bf16.msra.mxu0 0
        %993 = vmatprep.subr.bf16.mxu0 0
        %994 = vmatpush1.bf16.msra.mxu0 0
        %995 = vmatprep.subr.bf16.mxu0 0
        %996 = vmatpush1.bf16.msra.mxu0 0
        %997 = vmatprep.subr.bf16.mxu0 0
        %998 = vmatpush1.bf16.msra.mxu0 0
        %999 = vmatprep.subr.bf16.mxu0 0
        %1000 = vmatpush1.bf16.msra.mxu0 0
        %1001 = vmatprep.subr.bf16.mxu0 0
        %1002 = vmatpush1.bf16.msra.mxu0 0
        %1003 = vmatprep.subr.bf16.mxu0 0
        %1004 = vmatpush1.bf16.msra.mxu0 0
        %1005 = vmatprep.subr.bf16.mxu0 0
        %1006 = vmatpush1.bf16.msra.mxu0 0
        %1007 = vmatprep.subr.bf16.mxu0 0
        %1008 = vmatpush1.bf16.msra.mxu0 0
        %1009 = vmatprep.subr.bf16.mxu0 0
        %1010 = vmatpush1.bf16.msra.mxu0 0
        %1011 = vmatprep.subr.bf16.mxu0 0
        %1012 = vmatpush1.bf16.msra.mxu0 0
        %1013 = vmatprep.subr.bf16.mxu0 0
        %1014 = vmatpush1.bf16.msra.mxu0 0
        %1015 = vmatprep.mubr.bf16.mxu0 0
        %1016 = vmatmul.mubr.bf16.gmra.mrb[0].mxu0 %v981
        %v1017 = vpop.f32.mrb[0].mxu0
        %v1018 = vadd.f32 0.0, %v1017
        %v1019 = vpop.f32.mrb[0].mxu0
        %v1020 = vpop.f32.mrb[0].mxu0
        %v1021 = vpop.f32.mrb[0].mxu0
        %1022 = vdwg.mxu0
        %v1023 = vpack.c.bf16 %v1018, %v1018
        %v1025 = vsel %vm196, %v976, 0
        %1027 = vmatprep.subr.bf16.mxu0 0
        %1028 = vmatpush1.bf16.msra.mxu0 %v202
        %1029 = vmatprep.subr.bf16.mxu0 0
        %1030 = vmatpush1.bf16.msra.mxu0 0
        %1031 = vmatprep.subr.bf16.mxu0 0
        %1032 = vmatpush1.bf16.msra.mxu0 0
        %1033 = vmatprep.subr.bf16.mxu0 0
        %1034 = vmatpush1.bf16.msra.mxu0 0
        %1035 = vmatprep.subr.bf16.mxu0 0
        %1036 = vmatpush1.bf16.msra.mxu0 0
        %1037 = vmatprep.subr.bf16.mxu0 0
        %1038 = vmatpush1.bf16.msra.mxu0 0
        %1039 = vmatprep.subr.bf16.mxu0 0
        %1040 = vmatpush1.bf16.msra.mxu0 0
        %1041 = vmatprep.subr.bf16.mxu0 0
        %1042 = vmatpush1.bf16.msra.mxu0 0
        %1043 = vmatprep.subr.bf16.mxu0 0
        %1044 = vmatpush1.bf16.msra.mxu0 0
        %1045 = vmatprep.subr.bf16.mxu0 0
        %1046 = vmatpush1.bf16.msra.mxu0 0
        %1047 = vmatprep.subr.bf16.mxu0 0
        %1048 = vmatpush1.bf16.msra.mxu0 0
        %1049 = vmatprep.subr.bf16.mxu0 0
        %1050 = vmatpush1.bf16.msra.mxu0 0
        %1051 = vmatprep.subr.bf16.mxu0 0
        %1052 = vmatpush1.bf16.msra.mxu0 0
        %1053 = vmatprep.subr.bf16.mxu0 0
        %1054 = vmatpush1.bf16.msra.mxu0 0
        %1055 = vmatprep.subr.bf16.mxu0 0
        %1056 = vmatpush1.bf16.msra.mxu0 0
        %1057 = vmatprep.subr.bf16.mxu0 0
        %1058 = vmatpush1.bf16.msra.mxu0 0
        %1059 = vmatprep.mubr.bf16.mxu0 0
        %1060 = vmatmul.mubr.bf16.gmra.mrb[0].mxu0 %v1025
        %v1061 = vpop.f32.mrb[0].mxu0
        %v1062 = vadd.f32 0.0, %v1061
        %v1063 = vpop.f32.mrb[0].mxu0
        %v1064 = vpop.f32.mrb[0].mxu0
        %v1065 = vpop.f32.mrb[0].mxu0
        %1066 = vdwg.mxu0
        %v1067 = vpack.c.bf16 %v1062, %v1062
        %v1069 = vsel %vm196, %v979, 0
        %1071 = vmatprep.subr.bf16.mxu0 0
        %1072 = vmatpush1.bf16.msra.mxu0 %v202
        %1073 = vmatprep.subr.bf16.mxu0 0
        %1074 = vmatpush1.bf16.msra.mxu0 0
        %1075 = vmatprep.subr.bf16.mxu0 0
        %1076 = vmatpush1.bf16.msra.mxu0 0
        %1077 = vmatprep.subr.bf16.mxu0 0
        %1078 = vmatpush1.bf16.msra.mxu0 0
        %1079 = vmatprep.subr.bf16.mxu0 0
        %1080 = vmatpush1.bf16.msra.mxu0 0
        %1081 = vmatprep.subr.bf16.mxu0 0
        %1082 = vmatpush1.bf16.msra.mxu0 0
        %1083 = vmatprep.subr.bf16.mxu0 0
        %1084 = vmatpush1.bf16.msra.mxu0 0
        %1085 = vmatprep.subr.bf16.mxu0 0
        %1086 = vmatpush1.bf16.msra.mxu0 0
        %1087 = vmatprep.subr.bf16.mxu0 0
        %1088 = vmatpush1.bf16.msra.mxu0 0
        %1089 = vmatprep.subr.bf16.mxu0 0
        %1090 = vmatpush1.bf16.msra.mxu0 0
        %1091 = vmatprep.subr.bf16.mxu0 0
        %1092 = vmatpush1.bf16.msra.mxu0 0
        %1093 = vmatprep.subr.bf16.mxu0 0
        %1094 = vmatpush1.bf16.msra.mxu0 0
        %1095 = vmatprep.subr.bf16.mxu0 0
        %1096 = vmatpush1.bf16.msra.mxu0 0
        %1097 = vmatprep.subr.bf16.mxu0 0
        %1098 = vmatpush1.bf16.msra.mxu0 0
        %1099 = vmatprep.subr.bf16.mxu0 0
        %1100 = vmatpush1.bf16.msra.mxu0 0
        %1101 = vmatprep.subr.bf16.mxu0 0
        %1102 = vmatpush1.bf16.msra.mxu0 0
        %1103 = vmatprep.mubr.bf16.mxu0 0
        %1104 = vmatmul.mubr.bf16.gmra.mrb[0].mxu0 %v1069
        %v1105 = vpop.f32.mrb[0].mxu0
        %v1106 = vadd.f32 0.0, %v1105
        %v1107 = vpop.f32.mrb[0].mxu0
        %v1108 = vpop.f32.mrb[0].mxu0
        %v1109 = vpop.f32.mrb[0].mxu0
        %1110 = vdwg.mxu0
        %v1111 = vpack.c.bf16 %v1106, %v1106
        %v1113 = vsel %vm200, %v1111, 0
        %1115 = vmatprep.subr.bf16.mxu0 0
        %1116 = vmatpush1.bf16.msra.mxu0 %v1113
        %1117 = vmatprep.subr.bf16.mxu0 0
        %1118 = vmatpush1.bf16.msra.mxu0 0
        %1119 = vmatprep.subr.bf16.mxu0 0
        %1120 = vmatpush1.bf16.msra.mxu0 0
        %1121 = vmatprep.subr.bf16.mxu0 0
        %1122 = vmatpush1.bf16.msra.mxu0 0
        %1123 = vmatprep.subr.bf16.mxu0 0
        %1124 = vmatpush1.bf16.msra.mxu0 0
        %1125 = vmatprep.subr.bf16.mxu0 0
        %1126 = vmatpush1.bf16.msra.mxu0 0
        %1127 = vmatprep.subr.bf16.mxu0 0
        %1128 = vmatpush1.bf16.msra.mxu0 0
        %1129 = vmatprep.subr.bf16.mxu0 0
        %1130 = vmatpush1.bf16.msra.mxu0 0
        %1131 = vmatprep.subr.bf16.mxu0 0
        %1132 = vmatpush1.bf16.msra.mxu0 0
        %1133 = vmatprep.subr.bf16.mxu0 0
        %1134 = vmatpush1.bf16.msra.mxu0 0
        %1135 = vmatprep.subr.bf16.mxu0 0
        %1136 = vmatpush1.bf16.msra.mxu0 0
        %1137 = vmatprep.subr.bf16.mxu0 0
        %1138 = vmatpush1.bf16.msra.mxu0 0
        %1139 = vmatprep.subr.bf16.mxu0 0
        %1140 = vmatpush1.bf16.msra.mxu0 0
        %1141 = vmatprep.subr.bf16.mxu0 0
        %1142 = vmatpush1.bf16.msra.mxu0 0
        %1143 = vmatprep.subr.bf16.mxu0 0
        %1144 = vmatpush1.bf16.msra.mxu0 0
        %1145 = vmatprep.subr.bf16.mxu0 0
        %1146 = vmatpush1.bf16.msra.mxu0 0
        %1147 = vmatprep.mubr.bf16.mxu0 0
        %1148 = vmatmul.mubr.bf16.gmra.mrb[0].mxu0 %v334
        %v1149 = vpop.f32.mrb[0].mxu0
        %v1150 = vadd.f32 0.0, %v1149
        %v1151 = vpop.f32.mrb[0].mxu0
        %v1152 = vpop.f32.mrb[0].mxu0
        %v1153 = vpop.f32.mrb[0].mxu0
        %1154 = vdwg.mxu0
        %v1156 = vsel %vm200, %v1067, 0
        %1158 = vmatprep.subr.bf16.mxu0 0
        %1159 = vmatpush1.bf16.msra.mxu0 %v1156
        %1160 = vmatprep.subr.bf16.mxu0 0
        %1161 = vmatpush1.bf16.msra.mxu0 0
        %1162 = vmatprep.subr.bf16.mxu0 0
        %1163 = vmatpush1.bf16.msra.mxu0 0
        %1164 = vmatprep.subr.bf16.mxu0 0
        %1165 = vmatpush1.bf16.msra.mxu0 0
        %1166 = vmatprep.subr.bf16.mxu0 0
        %1167 = vmatpush1.bf16.msra.mxu0 0
        %1168 = vmatprep.subr.bf16.mxu0 0
        %1169 = vmatpush1.bf16.msra.mxu0 0
        %1170 = vmatprep.subr.bf16.mxu0 0
        %1171 = vmatpush1.bf16.msra.mxu0 0
        %1172 = vmatprep.subr.bf16.mxu0 0
        %1173 = vmatpush1.bf16.msra.mxu0 0
        %1174 = vmatprep.subr.bf16.mxu0 0
        %1175 = vmatpush1.bf16.msra.mxu0 0
        %1176 = vmatprep.subr.bf16.mxu0 0
        %1177 = vmatpush1.bf16.msra.mxu0 0
        %1178 = vmatprep.subr.bf16.mxu0 0
        %1179 = vmatpush1.bf16.msra.mxu0 0
        %1180 = vmatprep.subr.bf16.mxu0 0
        %1181 = vmatpush1.bf16.msra.mxu0 0
        %1182 = vmatprep.subr.bf16.mxu0 0
        %1183 = vmatpush1.bf16.msra.mxu0 0
        %1184 = vmatprep.subr.bf16.mxu0 0
        %1185 = vmatpush1.bf16.msra.mxu0 0
        %1186 = vmatprep.subr.bf16.mxu0 0
        %1187 = vmatpush1.bf16.msra.mxu0 0
        %1188 = vmatprep.subr.bf16.mxu0 0
        %1189 = vmatpush1.bf16.msra.mxu0 0
        %1190 = vmatprep.mubr.bf16.mxu0 0
        %1191 = vmatmul.mubr.bf16.gmra.mrb[0].mxu0 %v334
        %v1192 = vpop.f32.mrb[0].mxu0
        %v1193 = vadd.f32 %v1150, %v1192
        %v1194 = vpop.f32.mrb[0].mxu0
        %v1195 = vpop.f32.mrb[0].mxu0
        %v1196 = vpop.f32.mrb[0].mxu0
        %1197 = vdwg.mxu0
        %v1199 = vsel %vm200, %v1023, 0
        %1201 = vmatprep.subr.bf16.mxu0 0
        %1202 = vmatpush1.bf16.msra.mxu0 %v1199
        %1203 = vmatprep.subr.bf16.mxu0 0
        %1204 = vmatpush1.bf16.msra.mxu0 0
        %1205 = vmatprep.subr.bf16.mxu0 0
        %1206 = vmatpush1.bf16.msra.mxu0 0
        %1207 = vmatprep.subr.bf16.mxu0 0
        %1208 = vmatpush1.bf16.msra.mxu0 0
        %1209 = vmatprep.subr.bf16.mxu0 0
        %1210 = vmatpush1.bf16.msra.mxu0 0
        %1211 = vmatprep.subr.bf16.mxu0 0
        %1212 = vmatpush1.bf16.msra.mxu0 0
        %1213 = vmatprep.subr.bf16.mxu0 0
        %1214 = vmatpush1.bf16.msra.mxu0 0
        %1215 = vmatprep.subr.bf16.mxu0 0
        %1216 = vmatpush1.bf16.msra.mxu0 0
        %1217 = vmatprep.subr.bf16.mxu0 0
        %1218 = vmatpush1.bf16.msra.mxu0 0
        %1219 = vmatprep.subr.bf16.mxu0 0
        %1220 = vmatpush1.bf16.msra.mxu0 0
        %1221 = vmatprep.subr.bf16.mxu0 0
        %1222 = vmatpush1.bf16.msra.mxu0 0
        %1223 = vmatprep.subr.bf16.mxu0 0
        %1224 = vmatpush1.bf16.msra.mxu0 0
        %1225 = vmatprep.subr.bf16.mxu0 0
        %1226 = vmatpush1.bf16.msra.mxu0 0
        %1227 = vmatprep.subr.bf16.mxu0 0
        %1228 = vmatpush1.bf16.msra.mxu0 0
        %1229 = vmatprep.subr.bf16.mxu0 0
        %1230 = vmatpush1.bf16.msra.mxu0 0
        %1231 = vmatprep.subr.bf16.mxu0 0
        %1232 = vmatpush1.bf16.msra.mxu0 0
        %1233 = vmatprep.mubr.bf16.mxu0 0
        %1234 = vmatmul.mubr.bf16.gmra.mrb[0].mxu0 %v334
        %v1235 = vpop.f32.mrb[0].mxu0
        %v1236 = vadd.f32 %v1193, %v1235
        %v1237 = vpop.f32.mrb[0].mxu0
        %v1238 = vpop.f32.mrb[0].mxu0
        %v1239 = vpop.f32.mrb[0].mxu0
        %1240 = vdwg.mxu0
        %s1241 = scalar_lea.vmem %s165, 16
        %1242 = vst.msk [vmem:[%s1241] sm:$0xf] %vm465, %v1236
        %1243 = vmatprep.subr.bf16.mxu0 0
        %1244 = vmatpush1.bf16.msra.mxu0 %v1113
        %1245 = vmatprep.subr.bf16.mxu0 0
        %1246 = vmatpush1.bf16.msra.mxu0 0
        %1247 = vmatprep.subr.bf16.mxu0 0
        %1248 = vmatpush1.bf16.msra.mxu0 0
        %1249 = vmatprep.subr.bf16.mxu0 0
        %1250 = vmatpush1.bf16.msra.mxu0 0
        %1251 = vmatprep.subr.bf16.mxu0 0
        %1252 = vmatpush1.bf16.msra.mxu0 0
        %1253 = vmatprep.subr.bf16.mxu0 0
        %1254 = vmatpush1.bf16.msra.mxu0 0
        %1255 = vmatprep.subr.bf16.mxu0 0
        %1256 = vmatpush1.bf16.msra.mxu0 0
        %1257 = vmatprep.subr.bf16.mxu0 0
        %1258 = vmatpush1.bf16.msra.mxu0 0
        %1259 = vmatprep.subr.bf16.mxu0 0
        %1260 = vmatpush1.bf16.msra.mxu0 0
        %1261 = vmatprep.subr.bf16.mxu0 0
        %1262 = vmatpush1.bf16.msra.mxu0 0
        %1263 = vmatprep.subr.bf16.mxu0 0
        %1264 = vmatpush1.bf16.msra.mxu0 0
        %1265 = vmatprep.subr.bf16.mxu0 0
        %1266 = vmatpush1.bf16.msra.mxu0 0
        %1267 = vmatprep.subr.bf16.mxu0 0
        %1268 = vmatpush1.bf16.msra.mxu0 0
        %1269 = vmatprep.subr.bf16.mxu0 0
        %1270 = vmatpush1.bf16.msra.mxu0 0
        %1271 = vmatprep.subr.bf16.mxu0 0
        %1272 = vmatpush1.bf16.msra.mxu0 0
        %1273 = vmatprep.subr.bf16.mxu0 0
        %1274 = vmatpush1.bf16.msra.mxu0 0
        %1275 = vmatprep.mubr.bf16.mxu0 0
        %1276 = vmatmul.mubr.bf16.gmra.mrb[0].mxu0 %v468
        %v1277 = vpop.f32.mrb[0].mxu0
        %v1278 = vadd.f32 0.0, %v1277
        %v1279 = vpop.f32.mrb[0].mxu0
        %v1280 = vpop.f32.mrb[0].mxu0
        %v1281 = vpop.f32.mrb[0].mxu0
        %1282 = vdwg.mxu0
        %1283 = vmatprep.subr.bf16.mxu0 0
        %1284 = vmatpush1.bf16.msra.mxu0 %v1156
        %1285 = vmatprep.subr.bf16.mxu0 0
        %1286 = vmatpush1.bf16.msra.mxu0 0
        %1287 = vmatprep.subr.bf16.mxu0 0
        %1288 = vmatpush1.bf16.msra.mxu0 0
        %1289 = vmatprep.subr.bf16.mxu0 0
        %1290 = vmatpush1.bf16.msra.mxu0 0
        %1291 = vmatprep.subr.bf16.mxu0 0
        %1292 = vmatpush1.bf16.msra.mxu0 0
        %1293 = vmatprep.subr.bf16.mxu0 0
        %1294 = vmatpush1.bf16.msra.mxu0 0
        %1295 = vmatprep.subr.bf16.mxu0 0
        %1296 = vmatpush1.bf16.msra.mxu0 0
        %1297 = vmatprep.subr.bf16.mxu0 0
        %1298 = vmatpush1.bf16.msra.mxu0 0
        %1299 = vmatprep.subr.bf16.mxu0 0
        %1300 = vmatpush1.bf16.msra.mxu0 0
        %1301 = vmatprep.subr.bf16.mxu0 0
        %1302 = vmatpush1.bf16.msra.mxu0 0
        %1303 = vmatprep.subr.bf16.mxu0 0
        %1304 = vmatpush1.bf16.msra.mxu0 0
        %1305 = vmatprep.subr.bf16.mxu0 0
        %1306 = vmatpush1.bf16.msra.mxu0 0
        %1307 = vmatprep.subr.bf16.mxu0 0
        %1308 = vmatpush1.bf16.msra.mxu0 0
        %1309 = vmatprep.subr.bf16.mxu0 0
        %1310 = vmatpush1.bf16.msra.mxu0 0
        %1311 = vmatprep.subr.bf16.mxu0 0
        %1312 = vmatpush1.bf16.msra.mxu0 0
        %1313 = vmatprep.subr.bf16.mxu0 0
        %1314 = vmatpush1.bf16.msra.mxu0 0
        %1315 = vmatprep.mubr.bf16.mxu0 0
        %1316 = vmatmul.mubr.bf16.gmra.mrb[0].mxu0 %v468
        %v1317 = vpop.f32.mrb[0].mxu0
        %v1318 = vadd.f32 %v1278, %v1317
        %v1319 = vpop.f32.mrb[0].mxu0
        %v1320 = vpop.f32.mrb[0].mxu0
        %v1321 = vpop.f32.mrb[0].mxu0
        %1322 = vdwg.mxu0
        %1323 = vmatprep.subr.bf16.mxu0 0
        %1324 = vmatpush1.bf16.msra.mxu0 %v1199
        %1325 = vmatprep.subr.bf16.mxu0 0
        %1326 = vmatpush1.bf16.msra.mxu0 0
        %1327 = vmatprep.subr.bf16.mxu0 0
        %1328 = vmatpush1.bf16.msra.mxu0 0
        %1329 = vmatprep.subr.bf16.mxu0 0
        %1330 = vmatpush1.bf16.msra.mxu0 0
        %1331 = vmatprep.subr.bf16.mxu0 0
        %1332 = vmatpush1.bf16.msra.mxu0 0
        %1333 = vmatprep.subr.bf16.mxu0 0
        %1334 = vmatpush1.bf16.msra.mxu0 0
        %1335 = vmatprep.subr.bf16.mxu0 0
        %1336 = vmatpush1.bf16.msra.mxu0 0
        %1337 = vmatprep.subr.bf16.mxu0 0
        %1338 = vmatpush1.bf16.msra.mxu0 0
        %1339 = vmatprep.subr.bf16.mxu0 0
        %1340 = vmatpush1.bf16.msra.mxu0 0
        %1341 = vmatprep.subr.bf16.mxu0 0
        %1342 = vmatpush1.bf16.msra.mxu0 0
        %1343 = vmatprep.subr.bf16.mxu0 0
        %1344 = vmatpush1.bf16.msra.mxu0 0
        %1345 = vmatprep.subr.bf16.mxu0 0
        %1346 = vmatpush1.bf16.msra.mxu0 0
        %1347 = vmatprep.subr.bf16.mxu0 0
        %1348 = vmatpush1.bf16.msra.mxu0 0
        %1349 = vmatprep.subr.bf16.mxu0 0
        %1350 = vmatpush1.bf16.msra.mxu0 0
        %1351 = vmatprep.subr.bf16.mxu0 0
        %1352 = vmatpush1.bf16.msra.mxu0 0
        %1353 = vmatprep.subr.bf16.mxu0 0
        %1354 = vmatpush1.bf16.msra.mxu0 0
        %1355 = vmatprep.mubr.bf16.mxu0 0
        %1356 = vmatmul.mubr.bf16.gmra.mrb[0].mxu0 %v468
        %v1357 = vpop.f32.mrb[0].mxu0
        %v1358 = vadd.f32 %v1318, %v1357
        %v1359 = vpop.f32.mrb[0].mxu0
        %v1360 = vpop.f32.mrb[0].mxu0
        %v1361 = vpop.f32.mrb[0].mxu0
        %1362 = vdwg.mxu0
        %s1363 = scalar_lea.vmem %s165, 24
        %1364 = vst.msk [vmem:[%s1363] sm:$0xf] %vm465, %v1358
        %1365 = vmatprep.subr.bf16.mxu0 0
        %1366 = vmatpush1.bf16.msra.mxu0 %v593
        %1367 = vmatprep.subr.bf16.mxu0 0
        %1368 = vmatpush1.bf16.msra.mxu0 0
        %1369 = vmatprep.subr.bf16.mxu0 0
        %1370 = vmatpush1.bf16.msra.mxu0 0
        %1371 = vmatprep.subr.bf16.mxu0 0
        %1372 = vmatpush1.bf16.msra.mxu0 0
        %1373 = vmatprep.subr.bf16.mxu0 0
        %1374 = vmatpush1.bf16.msra.mxu0 0
        %1375 = vmatprep.subr.bf16.mxu0 0
        %1376 = vmatpush1.bf16.msra.mxu0 0
        %1377 = vmatprep.subr.bf16.mxu0 0
        %1378 = vmatpush1.bf16.msra.mxu0 0
        %1379 = vmatprep.subr.bf16.mxu0 0
        %1380 = vmatpush1.bf16.msra.mxu0 0
        %1381 = vmatprep.subr.bf16.mxu0 0
        %1382 = vmatpush1.bf16.msra.mxu0 0
        %1383 = vmatprep.subr.bf16.mxu0 0
        %1384 = vmatpush1.bf16.msra.mxu0 0
        %1385 = vmatprep.subr.bf16.mxu0 0
        %1386 = vmatpush1.bf16.msra.mxu0 0
        %1387 = vmatprep.subr.bf16.mxu0 0
        %1388 = vmatpush1.bf16.msra.mxu0 0
        %1389 = vmatprep.subr.bf16.mxu0 0
        %1390 = vmatpush1.bf16.msra.mxu0 0
        %1391 = vmatprep.subr.bf16.mxu0 0
        %1392 = vmatpush1.bf16.msra.mxu0 0
        %1393 = vmatprep.subr.bf16.mxu0 0
        %1394 = vmatpush1.bf16.msra.mxu0 0
        %1395 = vmatprep.subr.bf16.mxu0 0
        %1396 = vmatpush1.bf16.msra.mxu0 0
        %1397 = vmatprep.mubr.bf16.mxu0 0
        %1398 = vmatmul.mubr.bf16.gmra.mrb[0].mxu0 %v981
        %v1399 = vpop.f32.mrb[0].mxu0
        %v1400 = vadd.f32 0.0, %v1399
        %v1401 = vpop.f32.mrb[0].mxu0
        %v1402 = vpop.f32.mrb[0].mxu0
        %v1403 = vpop.f32.mrb[0].mxu0
        %1404 = vdwg.mxu0
        %v1405 = vpack.c.bf16 %v1400, %v1400
        %1406 = vmatprep.subr.bf16.mxu0 0
        %1407 = vmatpush1.bf16.msra.mxu0 %v593
        %1408 = vmatprep.subr.bf16.mxu0 0
        %1409 = vmatpush1.bf16.msra.mxu0 0
        %1410 = vmatprep.subr.bf16.mxu0 0
        %1411 = vmatpush1.bf16.msra.mxu0 0
        %1412 = vmatprep.subr.bf16.mxu0 0
        %1413 = vmatpush1.bf16.msra.mxu0 0
        %1414 = vmatprep.subr.bf16.mxu0 0
        %1415 = vmatpush1.bf16.msra.mxu0 0
        %1416 = vmatprep.subr.bf16.mxu0 0
        %1417 = vmatpush1.bf16.msra.mxu0 0
        %1418 = vmatprep.subr.bf16.mxu0 0
        %1419 = vmatpush1.bf16.msra.mxu0 0
        %1420 = vmatprep.subr.bf16.mxu0 0
        %1421 = vmatpush1.bf16.msra.mxu0 0
        %1422 = vmatprep.subr.bf16.mxu0 0
        %1423 = vmatpush1.bf16.msra.mxu0 0
        %1424 = vmatprep.subr.bf16.mxu0 0
        %1425 = vmatpush1.bf16.msra.mxu0 0
        %1426 = vmatprep.subr.bf16.mxu0 0
        %1427 = vmatpush1.bf16.msra.mxu0 0
        %1428 = vmatprep.subr.bf16.mxu0 0
        %1429 = vmatpush1.bf16.msra.mxu0 0
        %1430 = vmatprep.subr.bf16.mxu0 0
        %1431 = vmatpush1.bf16.msra.mxu0 0
        %1432 = vmatprep.subr.bf16.mxu0 0
        %1433 = vmatpush1.bf16.msra.mxu0 0
        %1434 = vmatprep.subr.bf16.mxu0 0
        %1435 = vmatpush1.bf16.msra.mxu0 0
        %1436 = vmatprep.subr.bf16.mxu0 0
        %1437 = vmatpush1.bf16.msra.mxu0 0
        %1438 = vmatprep.mubr.bf16.mxu0 0
        %1439 = vmatmul.mubr.bf16.gmra.mrb[0].mxu0 %v1025
        %v1440 = vpop.f32.mrb[0].mxu0
        %v1441 = vadd.f32 0.0, %v1440
        %v1442 = vpop.f32.mrb[0].mxu0
        %v1443 = vpop.f32.mrb[0].mxu0
        %v1444 = vpop.f32.mrb[0].mxu0
        %1445 = vdwg.mxu0
        %v1446 = vpack.c.bf16 %v1441, %v1441
        %1447 = vmatprep.subr.bf16.mxu0 0
        %1448 = vmatpush1.bf16.msra.mxu0 %v593
        %1449 = vmatprep.subr.bf16.mxu0 0
        %1450 = vmatpush1.bf16.msra.mxu0 0
        %1451 = vmatprep.subr.bf16.mxu0 0
        %1452 = vmatpush1.bf16.msra.mxu0 0
        %1453 = vmatprep.subr.bf16.mxu0 0
        %1454 = vmatpush1.bf16.msra.mxu0 0
        %1455 = vmatprep.subr.bf16.mxu0 0
        %1456 = vmatpush1.bf16.msra.mxu0 0
        %1457 = vmatprep.subr.bf16.mxu0 0
        %1458 = vmatpush1.bf16.msra.mxu0 0
        %1459 = vmatprep.subr.bf16.mxu0 0
        %1460 = vmatpush1.bf16.msra.mxu0 0
        %1461 = vmatprep.subr.bf16.mxu0 0
        %1462 = vmatpush1.bf16.msra.mxu0 0
        %1463 = vmatprep.subr.bf16.mxu0 0
        %1464 = vmatpush1.bf16.msra.mxu0 0
        %1465 = vmatprep.subr.bf16.mxu0 0
        %1466 = vmatpush1.bf16.msra.mxu0 0
        %1467 = vmatprep.subr.bf16.mxu0 0
        %1468 = vmatpush1.bf16.msra.mxu0 0
        %1469 = vmatprep.subr.bf16.mxu0 0
        %1470 = vmatpush1.bf16.msra.mxu0 0
        %1471 = vmatprep.subr.bf16.mxu0 0
        %1472 = vmatpush1.bf16.msra.mxu0 0
        %1473 = vmatprep.subr.bf16.mxu0 0
        %1474 = vmatpush1.bf16.msra.mxu0 0
        %1475 = vmatprep.subr.bf16.mxu0 0
        %1476 = vmatpush1.bf16.msra.mxu0 0
        %1477 = vmatprep.subr.bf16.mxu0 0
        %1478 = vmatpush1.bf16.msra.mxu0 0
        %1479 = vmatprep.mubr.bf16.mxu0 0
        %1480 = vmatmul.mubr.bf16.gmra.mrb[0].mxu0 %v1069
        %v1481 = vpop.f32.mrb[0].mxu0
        %v1482 = vadd.f32 0.0, %v1481
        %v1483 = vpop.f32.mrb[0].mxu0
        %v1484 = vpop.f32.mrb[0].mxu0
        %v1485 = vpop.f32.mrb[0].mxu0
        %1486 = vdwg.mxu0
        %v1487 = vpack.c.bf16 %v1482, %v1482
        %v1489 = vsel %vm200, %v1487, 0
        %1491 = vmatprep.subr.bf16.mxu0 0
        %1492 = vmatpush1.bf16.msra.mxu0 %v1489
        %1493 = vmatprep.subr.bf16.mxu0 0
        %1494 = vmatpush1.bf16.msra.mxu0 0
        %1495 = vmatprep.subr.bf16.mxu0 0
        %1496 = vmatpush1.bf16.msra.mxu0 0
        %1497 = vmatprep.subr.bf16.mxu0 0
        %1498 = vmatpush1.bf16.msra.mxu0 0
        %1499 = vmatprep.subr.bf16.mxu0 0
        %1500 = vmatpush1.bf16.msra.mxu0 0
        %1501 = vmatprep.subr.bf16.mxu0 0
        %1502 = vmatpush1.bf16.msra.mxu0 0
        %1503 = vmatprep.subr.bf16.mxu0 0
        %1504 = vmatpush1.bf16.msra.mxu0 0
        %1505 = vmatprep.subr.bf16.mxu0 0
        %1506 = vmatpush1.bf16.msra.mxu0 0
        %1507 = vmatprep.subr.bf16.mxu0 0
        %1508 = vmatpush1.bf16.msra.mxu0 0
        %1509 = vmatprep.subr.bf16.mxu0 0
        %1510 = vmatpush1.bf16.msra.mxu0 0
        %1511 = vmatprep.subr.bf16.mxu0 0
        %1512 = vmatpush1.bf16.msra.mxu0 0
        %1513 = vmatprep.subr.bf16.mxu0 0
        %1514 = vmatpush1.bf16.msra.mxu0 0
        %1515 = vmatprep.subr.bf16.mxu0 0
        %1516 = vmatpush1.bf16.msra.mxu0 0
        %1517 = vmatprep.subr.bf16.mxu0 0
        %1518 = vmatpush1.bf16.msra.mxu0 0
        %1519 = vmatprep.subr.bf16.mxu0 0
        %1520 = vmatpush1.bf16.msra.mxu0 0
        %1521 = vmatprep.subr.bf16.mxu0 0
        %1522 = vmatpush1.bf16.msra.mxu0 0
        %1523 = vmatprep.mubr.bf16.mxu0 0
        %1524 = vmatmul.mubr.bf16.gmra.mrb[0].mxu0 %v334
        %v1525 = vpop.f32.mrb[0].mxu0
        %v1526 = vadd.f32 0.0, %v1525
        %v1527 = vpop.f32.mrb[0].mxu0
        %v1528 = vpop.f32.mrb[0].mxu0
        %v1529 = vpop.f32.mrb[0].mxu0
        %1530 = vdwg.mxu0
        %v1532 = vsel %vm200, %v1446, 0
        %1534 = vmatprep.subr.bf16.mxu0 0
        %1535 = vmatpush1.bf16.msra.mxu0 %v1532
        %1536 = vmatprep.subr.bf16.mxu0 0
        %1537 = vmatpush1.bf16.msra.mxu0 0
        %1538 = vmatprep.subr.bf16.mxu0 0
        %1539 = vmatpush1.bf16.msra.mxu0 0
        %1540 = vmatprep.subr.bf16.mxu0 0
        %1541 = vmatpush1.bf16.msra.mxu0 0
        %1542 = vmatprep.subr.bf16.mxu0 0
        %1543 = vmatpush1.bf16.msra.mxu0 0
        %1544 = vmatprep.subr.bf16.mxu0 0
        %1545 = vmatpush1.bf16.msra.mxu0 0
        %1546 = vmatprep.subr.bf16.mxu0 0
        %1547 = vmatpush1.bf16.msra.mxu0 0
        %1548 = vmatprep.subr.bf16.mxu0 0
        %1549 = vmatpush1.bf16.msra.mxu0 0
        %1550 = vmatprep.subr.bf16.mxu0 0
        %1551 = vmatpush1.bf16.msra.mxu0 0
        %1552 = vmatprep.subr.bf16.mxu0 0
        %1553 = vmatpush1.bf16.msra.mxu0 0
        %1554 = vmatprep.subr.bf16.mxu0 0
        %1555 = vmatpush1.bf16.msra.mxu0 0
        %1556 = vmatprep.subr.bf16.mxu0 0
        %1557 = vmatpush1.bf16.msra.mxu0 0
        %1558 = vmatprep.subr.bf16.mxu0 0
        %1559 = vmatpush1.bf16.msra.mxu0 0
        %1560 = vmatprep.subr.bf16.mxu0 0
        %1561 = vmatpush1.bf16.msra.mxu0 0
        %1562 = vmatprep.subr.bf16.mxu0 0
        %1563 = vmatpush1.bf16.msra.mxu0 0
        %1564 = vmatprep.subr.bf16.mxu0 0
        %1565 = vmatpush1.bf16.msra.mxu0 0
        %1566 = vmatprep.mubr.bf16.mxu0 0
        %1567 = vmatmul.mubr.bf16.gmra.mrb[0].mxu0 %v334
        %v1568 = vpop.f32.mrb[0].mxu0
        %v1569 = vadd.f32 %v1526, %v1568
        %v1570 = vpop.f32.mrb[0].mxu0
        %v1571 = vpop.f32.mrb[0].mxu0
        %v1572 = vpop.f32.mrb[0].mxu0
        %1573 = vdwg.mxu0
        %v1575 = vsel %vm200, %v1405, 0
        %1577 = vmatprep.subr.bf16.mxu0 0
        %1578 = vmatpush1.bf16.msra.mxu0 %v1575
        %1579 = vmatprep.subr.bf16.mxu0 0
        %1580 = vmatpush1.bf16.msra.mxu0 0
        %1581 = vmatprep.subr.bf16.mxu0 0
        %1582 = vmatpush1.bf16.msra.mxu0 0
        %1583 = vmatprep.subr.bf16.mxu0 0
        %1584 = vmatpush1.bf16.msra.mxu0 0
        %1585 = vmatprep.subr.bf16.mxu0 0
        %1586 = vmatpush1.bf16.msra.mxu0 0
        %1587 = vmatprep.subr.bf16.mxu0 0
        %1588 = vmatpush1.bf16.msra.mxu0 0
        %1589 = vmatprep.subr.bf16.mxu0 0
        %1590 = vmatpush1.bf16.msra.mxu0 0
        %1591 = vmatprep.subr.bf16.mxu0 0
        %1592 = vmatpush1.bf16.msra.mxu0 0
        %1593 = vmatprep.subr.bf16.mxu0 0
        %1594 = vmatpush1.bf16.msra.mxu0 0
        %1595 = vmatprep.subr.bf16.mxu0 0
        %1596 = vmatpush1.bf16.msra.mxu0 0
        %1597 = vmatprep.subr.bf16.mxu0 0
        %1598 = vmatpush1.bf16.msra.mxu0 0
        %1599 = vmatprep.subr.bf16.mxu0 0
        %1600 = vmatpush1.bf16.msra.mxu0 0
        %1601 = vmatprep.subr.bf16.mxu0 0
        %1602 = vmatpush1.bf16.msra.mxu0 0
        %1603 = vmatprep.subr.bf16.mxu0 0
        %1604 = vmatpush1.bf16.msra.mxu0 0
        %1605 = vmatprep.subr.bf16.mxu0 0
        %1606 = vmatpush1.bf16.msra.mxu0 0
        %1607 = vmatprep.subr.bf16.mxu0 0
        %1608 = vmatpush1.bf16.msra.mxu0 0
        %1609 = vmatprep.mubr.bf16.mxu0 0
        %1610 = vmatmul.mubr.bf16.gmra.mrb[0].mxu0 %v334
        %v1611 = vpop.f32.mrb[0].mxu0
        %v1612 = vadd.f32 %v1569, %v1611
        %v1613 = vpop.f32.mrb[0].mxu0
        %v1614 = vpop.f32.mrb[0].mxu0
        %v1615 = vpop.f32.mrb[0].mxu0
        %1616 = vdwg.mxu0
        %s1617 = scalar_lea.vmem %s165, 20
        %1618 = vst.msk [vmem:[%s1617] sm:$0xf] %vm465, %v1612
        %1619 = vmatprep.subr.bf16.mxu0 0
        %1620 = vmatpush1.bf16.msra.mxu0 %v1489
        %1621 = vmatprep.subr.bf16.mxu0 0
        %1622 = vmatpush1.bf16.msra.mxu0 0
        %1623 = vmatprep.subr.bf16.mxu0 0
        %1624 = vmatpush1.bf16.msra.mxu0 0
        %1625 = vmatprep.subr.bf16.mxu0 0
        %1626 = vmatpush1.bf16.msra.mxu0 0
        %1627 = vmatprep.subr.bf16.mxu0 0
        %1628 = vmatpush1.bf16.msra.mxu0 0
        %1629 = vmatprep.subr.bf16.mxu0 0
        %1630 = vmatpush1.bf16.msra.mxu0 0
        %1631 = vmatprep.subr.bf16.mxu0 0
        %1632 = vmatpush1.bf16.msra.mxu0 0
        %1633 = vmatprep.subr.bf16.mxu0 0
        %1634 = vmatpush1.bf16.msra.mxu0 0
        %1635 = vmatprep.subr.bf16.mxu0 0
        %1636 = vmatpush1.bf16.msra.mxu0 0
        %1637 = vmatprep.subr.bf16.mxu0 0
        %1638 = vmatpush1.bf16.msra.mxu0 0
        %1639 = vmatprep.subr.bf16.mxu0 0
        %1640 = vmatpush1.bf16.msra.mxu0 0
        %1641 = vmatprep.subr.bf16.mxu0 0
        %1642 = vmatpush1.bf16.msra.mxu0 0
        %1643 = vmatprep.subr.bf16.mxu0 0
        %1644 = vmatpush1.bf16.msra.mxu0 0
        %1645 = vmatprep.subr.bf16.mxu0 0
        %1646 = vmatpush1.bf16.msra.mxu0 0
        %1647 = vmatprep.subr.bf16.mxu0 0
        %1648 = vmatpush1.bf16.msra.mxu0 0
        %1649 = vmatprep.subr.bf16.mxu0 0
        %1650 = vmatpush1.bf16.msra.mxu0 0
        %1651 = vmatprep.mubr.bf16.mxu0 0
        %1652 = vmatmul.mubr.bf16.gmra.mrb[0].mxu0 %v468
        %v1653 = vpop.f32.mrb[0].mxu0
        %v1654 = vadd.f32 0.0, %v1653
        %v1655 = vpop.f32.mrb[0].mxu0
        %v1656 = vpop.f32.mrb[0].mxu0
        %v1657 = vpop.f32.mrb[0].mxu0
        %1658 = vdwg.mxu0
        %1659 = vmatprep.subr.bf16.mxu0 0
        %1660 = vmatpush1.bf16.msra.mxu0 %v1532
        %1661 = vmatprep.subr.bf16.mxu0 0
        %1662 = vmatpush1.bf16.msra.mxu0 0
        %1663 = vmatprep.subr.bf16.mxu0 0
        %1664 = vmatpush1.bf16.msra.mxu0 0
        %1665 = vmatprep.subr.bf16.mxu0 0
        %1666 = vmatpush1.bf16.msra.mxu0 0
        %1667 = vmatprep.subr.bf16.mxu0 0
        %1668 = vmatpush1.bf16.msra.mxu0 0
        %1669 = vmatprep.subr.bf16.mxu0 0
        %1670 = vmatpush1.bf16.msra.mxu0 0
        %1671 = vmatprep.subr.bf16.mxu0 0
        %1672 = vmatpush1.bf16.msra.mxu0 0
        %1673 = vmatprep.subr.bf16.mxu0 0
        %1674 = vmatpush1.bf16.msra.mxu0 0
        %1675 = vmatprep.subr.bf16.mxu0 0
        %1676 = vmatpush1.bf16.msra.mxu0 0
        %1677 = vmatprep.subr.bf16.mxu0 0
        %1678 = vmatpush1.bf16.msra.mxu0 0
        %1679 = vmatprep.subr.bf16.mxu0 0
        %1680 = vmatpush1.bf16.msra.mxu0 0
        %1681 = vmatprep.subr.bf16.mxu0 0
        %1682 = vmatpush1.bf16.msra.mxu0 0
        %1683 = vmatprep.subr.bf16.mxu0 0
        %1684 = vmatpush1.bf16.msra.mxu0 0
        %1685 = vmatprep.subr.bf16.mxu0 0
        %1686 = vmatpush1.bf16.msra.mxu0 0
        %1687 = vmatprep.subr.bf16.mxu0 0
        %1688 = vmatpush1.bf16.msra.mxu0 0
        %1689 = vmatprep.subr.bf16.mxu0 0
        %1690 = vmatpush1.bf16.msra.mxu0 0
        %1691 = vmatprep.mubr.bf16.mxu0 0
        %1692 = vmatmul.mubr.bf16.gmra.mrb[0].mxu0 %v468
        %v1693 = vpop.f32.mrb[0].mxu0
        %v1694 = vadd.f32 %v1654, %v1693
        %v1695 = vpop.f32.mrb[0].mxu0
        %v1696 = vpop.f32.mrb[0].mxu0
        %v1697 = vpop.f32.mrb[0].mxu0
        %1698 = vdwg.mxu0
        %1699 = vmatprep.subr.bf16.mxu0 0
        %1700 = vmatpush1.bf16.msra.mxu0 %v1575
        %1701 = vmatprep.subr.bf16.mxu0 0
        %1702 = vmatpush1.bf16.msra.mxu0 0
        %1703 = vmatprep.subr.bf16.mxu0 0
        %1704 = vmatpush1.bf16.msra.mxu0 0
        %1705 = vmatprep.subr.bf16.mxu0 0
        %1706 = vmatpush1.bf16.msra.mxu0 0
        %1707 = vmatprep.subr.bf16.mxu0 0
        %1708 = vmatpush1.bf16.msra.mxu0 0
        %1709 = vmatprep.subr.bf16.mxu0 0
        %1710 = vmatpush1.bf16.msra.mxu0 0
        %1711 = vmatprep.subr.bf16.mxu0 0
        %1712 = vmatpush1.bf16.msra.mxu0 0
        %1713 = vmatprep.subr.bf16.mxu0 0
        %1714 = vmatpush1.bf16.msra.mxu0 0
        %1715 = vmatprep.subr.bf16.mxu0 0
        %1716 = vmatpush1.bf16.msra.mxu0 0
        %1717 = vmatprep.subr.bf16.mxu0 0
        %1718 = vmatpush1.bf16.msra.mxu0 0
        %1719 = vmatprep.subr.bf16.mxu0 0
        %1720 = vmatpush1.bf16.msra.mxu0 0
        %1721 = vmatprep.subr.bf16.mxu0 0
        %1722 = vmatpush1.bf16.msra.mxu0 0
        %1723 = vmatprep.subr.bf16.mxu0 0
        %1724 = vmatpush1.bf16.msra.mxu0 0
        %1725 = vmatprep.subr.bf16.mxu0 0
        %1726 = vmatpush1.bf16.msra.mxu0 0
        %1727 = vmatprep.subr.bf16.mxu0 0
        %1728 = vmatpush1.bf16.msra.mxu0 0
        %1729 = vmatprep.subr.bf16.mxu0 0
        %1730 = vmatpush1.bf16.msra.mxu0 0
        %1731 = vmatprep.mubr.bf16.mxu0 0
        %1732 = vmatmul.mubr.bf16.gmra.mrb[0].mxu0 %v468
        %v1733 = vpop.f32.mrb[0].mxu0
        %v1734 = vadd.f32 %v1694, %v1733
        %v1735 = vpop.f32.mrb[0].mxu0
        %v1736 = vpop.f32.mrb[0].mxu0
        %v1737 = vpop.f32.mrb[0].mxu0
        %1738 = vdwg.mxu0
        %s1739 = scalar_lea.vmem %s165, 28
        %1740 = vst.msk [vmem:[%s1739] sm:$0xf] %vm465, %v1734
        %s1741 = smul.u32 2, %s20
        %p1742 = scmp.lt.s32.totalorder %s19, 7
        %s1743 = scalar_select %p1742, %s19, 7
        %p1744 = scmp.lt.s32.totalorder %s1741, 1
        %s1745 = scalar_select %p1744, %s1741, 1
        %s1746 = smul.addr %s1745, 4
        %s1747 = smul.addr %s1743, 8
        %s1748 = sadd.s32 %s1746, %s1747
        %s1749 = smul.addr %s1748, 4
        %s1750 = scalar_lea.vmem %s1, %s1749
        // Predicated region
        $region29: #{tpu_custom_call.1} parent=23 // pred_check
          %p1751 = pneg %p75
        $region30: #{tpu_custom_call.1} parent=23 // pred_check_branch
          %1753 = sbr.rel (%p1751) target = $region32
        $region31: #{tpu_custom_call.1} parent=23 // pred_region
          %s1754 = smul.u32 2, %s20
        $region32: #{tpu_custom_call.1} parent=23 // pred_fallthru
          _
      $region24: #{tpu_custom_call.1} parent=5 // pred_fallthru
        _
      %p1755 = scmp.le.s32.totalorder 2, %s10
      // Predicated region
      $region33: #{tpu_custom_call.1} parent=5 // pred_check
        %p1756 = pneg %p1755
      $region34: #{tpu_custom_call.1} parent=5 // pred_check_branch
        %1758 = sbr.rel (%p1756) target = $region36
      $region35: #{tpu_custom_call.1} parent=5 // pred_region
        %s1759 = ssub.s32 %s10, 2
        // Predicated region
        $region37: #{tpu_custom_call.1} parent=35 // pred_check
          %p1760 = pneg %p81
        $region38: #{tpu_custom_call.1} parent=35 // pred_check_branch
          %1762 = sbr.rel (%p1760) target = $region40
        $region39: #{tpu_custom_call.1} parent=35 // pred_region
          %s1763 = smul.u32 2, %s22
          %p1764 = scmp.lt.s32.totalorder %s21, 7
          %s1765 = scalar_select %p1764, %s21, 7
          %p1766 = scmp.lt.s32.totalorder %s1763, 1
          %s1767 = scalar_select %p1766, %s1763, 1
          %s1768 = smul.addr %s1767, 4
          %s1769 = smul.addr %s1765, 8
          %s1770 = sadd.s32 %s1768, %s1769
          %s1771 = smul.addr %s1770, 4
          %s1772 = scalar_lea.vmem %s1, %s1771
        $region40: #{tpu_custom_call.1} parent=35 // pred_fallthru
          _
      $region36: #{tpu_custom_call.1} parent=5 // pred_fallthru
        _
    $region6: #{tpu_custom_call.1} parent=1 // loop_footer
      %s14 = sadd.s32 1, %s10
    $region7: #{tpu_custom_call.1} parent=1 // loop_footer_branch
      %9 = sbr.rel target = $region3
    $region8: #{tpu_custom_call.1} parent=1 // loop_exit
      _
    %1773 = vsyncpa [#allocation3], 1
    %s1774 = scalar_lea.sflag [#allocation3], 1
    %1775 = vsyncpa %s1774, 1

</llo_original>
